<compile_context>
chip_gen: v5e
topology: v5e:2x2
jax: 0.10.0
libtpu: 0.0.40
codegen_flags: <defaults>
</compile_context>

<pallas_src>
import functools

import jax
import jax.numpy as jnp
from jax import lax
from jax.experimental import pallas as pl
from jax.experimental.pallas import tpu as pltpu

_INV_SQRT2 = 0.7071067811865476
_EPS = 1e-5


def _gelu(v, approx=False):
    if approx:
        # tanh approx rides the EUP slot (frees VALU bundles); off by default
        # to match PyTorch's exact-erf nn.GELU().
        return jax.nn.gelu(v, approximate=True)
    return 0.5 * v * (1.0 + lax.erf(v * _INV_SQRT2))


@functools.lru_cache(maxsize=1)
def _vmem_limit_bytes():
    """Per-generation scoped-VMEM limit (~3/4 of physical, capped)."""
    try:
        cap = getattr(pltpu.get_tpu_info(), "vmem_capacity_bytes", None)
        if cap:
            return int(min(cap * 3 // 4, 100 * 1024 * 1024))
    except Exception:
        pass
    return 32 * 1024 * 1024


def _tile_budget_bytes():
    return max(6 * 1024 * 1024, min(_vmem_limit_bytes() // 3, 40 * 1024 * 1024))


def _pick_tile_rows(h, w, cin, cout, in_bytes, out_bytes, n_imgs, budget=None):
    """Largest row-tile (dividing H) whose working set fits the VMEM budget.

    Accounts for double-buffered input / halo / output blocks, the bf16
    kw-im2col scratch, the f32 matmul accumulator and the f32 transform
    temporaries.  Prefers tiles leaving >= 2 grid steps (v7x has 2 TCs).
    """
    if budget is None:
        budget = _tile_budget_bytes()
    fitting = []
    for th in range(1, h + 1):
        if h % th:
            continue
        working = (2 * th * w * cin * in_bytes          # center input (dbl-buf)
                   + 4 * w * cin * in_bytes             # halo rows (dbl-buf)
                   + 2 * th * w * cout * out_bytes      # output tile (dbl-buf)
                   + (th + 2) * w * 3 * cin * 2         # bf16 im2col scratch
                   + th * w * cout * 4                  # f32 accumulator
                   + 2 * th * w * cin * 4               # f32 transform temps
                   + 2 * 9 * cin * cout * 2             # bf16 weights (dbl-buf)
                   + (1 << 16))
        if working <= budget:
            fitting.append(th)
    if not fitting:
        return 1
    multi = [t for t in fitting if n_imgs * (h // t) >= 2]
    return max(multi) if multi else max(fitting)


# ---------------------------------------------------------------------------
# Fused conv kernel:
#   [optional per-channel affine (folded BN of prev stage) + GELU on the input]
#   -> kw-im2col in VMEM -> 3 MXU matmuls (K = 3*Cin, f32 accumulation)
#   -> raw conv output tile + per-tile channel sum / sum-of-squares
# ---------------------------------------------------------------------------
def _conv_bn_kernel(scale_ref, shift_ref, x_ref, top_ref, bot_ref, w_ref,
                    y_ref, stat_ref, xcol_ref, *, apply_input_act, approx_gelu):
    j = pl.program_id(1)
    n_tiles = pl.num_programs(1)
    _, th, wsz, cin = x_ref.shape
    cout = y_ref.shape[-1]

    def _transform(v):
        v = v.astype(jnp.float32)
        if apply_input_act:            # folded BN of the previous stage + GELU
            v = v * scale_ref[...] + shift_ref[...]
            v = _gelu(v, approx_gelu)
        return v.astype(xcol_ref.dtype)

    def _scatter(row0, t):
        # xcol[r, x, kw*cin + c] = input[r-1, x+kw-1, c]   (zero outside image)
        nr = t.shape[0]
        xcol_ref[row0:row0 + nr, :, cin:2 * cin] = t
        xcol_ref[row0:row0 + nr, 1:wsz, 0:cin] = t[:, 0:wsz - 1, :]
        xcol_ref[row0:row0 + nr, 0:wsz - 1, 2 * cin:3 * cin] = t[:, 1:wsz, :]

    # Permanent zero-padding entries (never touched by data writes). Tiny, and
    # rewritten every step so it is safe with per-core scratch on megacore.
    zcol = jnp.zeros((th + 2, 1, cin), xcol_ref.dtype)
    xcol_ref[:, 0:1, 0:cin] = zcol
    xcol_ref[:, wsz - 1:wsz, 2 * cin:3 * cin] = zcol

    # Interior rows are fully overwritten -> no scratch re-zero needed.
    _scatter(1, _transform(x_ref[0]))

    # Top halo row: zero at image top edge, else the pipeline-prefetched row.
    @pl.when(j == 0)
    def _():
        xcol_ref[0:1, :, :] = jnp.zeros((1, wsz, 3 * cin), xcol_ref.dtype)

    @pl.when(j > 0)
    def _():
        _scatter(0, _transform(top_ref[0]))

    # Bottom halo row.
    @pl.when(j == n_tiles - 1)
    def _():
        xcol_ref[th + 1:th + 2, :, :] = jnp.zeros((1, wsz, 3 * cin),
                                                  xcol_ref.dtype)

    @pl.when(j < n_tiles - 1)
    def _():
        _scatter(th + 1, _transform(bot_ref[0]))

    # 3x3 conv as 3 matmuls with K = 3*cin; kh shifts are leading-dim offsets.
    wt = w_ref[...]                                          # (3, 3*cin, cout)
    acc = jnp.dot(xcol_ref[0:th, :, :].reshape(th * wsz, 3 * cin), wt[0],
                  preferred_element_type=jnp.float32)
    acc = acc + jnp.dot(xcol_ref[1:th + 1, :, :].reshape(th * wsz, 3 * cin),
                        wt[1], preferred_element_type=jnp.float32)
    acc = acc + jnp.dot(xcol_ref[2:th + 2, :, :].reshape(th * wsz, 3 * cin),
                        wt[2], preferred_element_type=jnp.float32)

    y_ref[...] = acc.reshape(1, th, wsz, cout).astype(y_ref.dtype)
    # per-tile BN statistics, taken from the f32 accumulator (no HBM re-read)
    stat_ref[0, 0, 0:1, :] = jnp.sum(acc, axis=0, keepdims=True)
    stat_ref[0, 0, 1:2, :] = jnp.sum(acc * acc, axis=0, keepdims=True)


# ---------------------------------------------------------------------------
# Final folded-BN + GELU elementwise kernel (stage 2 epilogue), row-tiled.
# ---------------------------------------------------------------------------
def _bn_act_kernel(scale_ref, shift_ref, x_ref, o_ref, *, approx_gelu):
    v = x_ref[...].astype(jnp.float32)
    v = v * scale_ref[...] + shift_ref[...]
    o_ref[...] = _gelu(v, approx_gelu).astype(o_ref.dtype)


# ---------------------------------------------------------------------------
# Wrappers
# ---------------------------------------------------------------------------
def conv3x3_bn_stats(x_nhwc, w, in_scale=None, in_shift=None, *,
                     out_dtype=jnp.bfloat16, tile_rows=None, approx_gelu=False):
    """3x3 bias-free conv with optional fused input affine+GELU.

    Returns (y, stats); stats[n, j, 0] / stats[n, j, 1] are the per-row-tile
    channel sums / sums-of-squares of the f32 conv output.
    """
    n, h, wd, cin = x_nhwc.shape
    cout = w.shape[-1]
    if tile_rows is None:
        tile_rows = _pick_tile_rows(h, wd, cin, cout,
                                    x_nhwc.dtype.itemsize,
                                    jnp.dtype(out_dtype).itemsize, n)
    assert h % tile_rows == 0, (h, tile_rows)
    th = tile_rows
    ht = h // th

    apply_act = in_scale is not None
    if not apply_act:
        in_scale = jnp.ones((1, cin), jnp.float32)
        in_shift = jnp.zeros((1, cin), jnp.float32)
    else:
        in_scale = in_scale.reshape(1, cin).astype(jnp.float32)
        in_shift = in_shift.reshape(1, cin).astype(jnp.float32)
    w2 = w.reshape(3, 3 * cin, cout).astype(jnp.bfloat16)    # (kh, kw*cin, cout)

    def _top_map(i, j):        # row above this tile, clamped (unused at j==0)
        return (i, jnp.maximum(j * th - 1, 0), 0, 0)

    def _bot_map(i, j):        # row below this tile, clamped (unused at last j)
        return (i, jnp.minimum((j + 1) * th, h - 1), 0, 0)

    kernel = functools.partial(_conv_bn_kernel, apply_input_act=apply_act,
                               approx_gelu=approx_gelu)
    y, stats = pl.pallas_call(
        kernel,
        out_shape=(jax.ShapeDtypeStruct((n, h, wd, cout), out_dtype),
                   jax.ShapeDtypeStruct((n, ht, 2, cout), jnp.float32)),
        grid=(n, ht),
        in_specs=[
            pl.BlockSpec((1, cin), lambda i, j: (0, 0)),
            pl.BlockSpec((1, cin), lambda i, j: (0, 0)),
            pl.BlockSpec((1, th, wd, cin), lambda i, j: (i, j, 0, 0)),
            pl.BlockSpec((1, 1, wd, cin), _top_map),   # top halo (auto-pipelined)
            pl.BlockSpec((1, 1, wd, cin), _bot_map),   # bottom halo (auto-pipelined)
            pl.BlockSpec((3, 3 * cin, cout), lambda i, j: (0, 0, 0)),
        ],
        out_specs=(
            pl.BlockSpec((1, th, wd, cout), lambda i, j: (i, j, 0, 0)),
            pl.BlockSpec((1, 1, 2, cout), lambda i, j: (i, j, 0, 0)),
        ),
        scratch_shapes=[
            pltpu.VMEM((th + 2, wd, 3 * cin), jnp.bfloat16),  # kw-im2col scratch
        ],
        compiler_params=pltpu.CompilerParams(
            dimension_semantics=("parallel", "parallel"),
            vmem_limit_bytes=_vmem_limit_bytes()),
    )(in_scale, in_shift, x_nhwc, x_nhwc, x_nhwc, w2)
    return y, stats


def bn_act(x_nhwc, scale, shift, *, tile_rows=None, approx_gelu=False):
    n, h, w, c = x_nhwc.shape
    if tile_rows is None:
        tile_rows = _pick_tile_rows(h, w, c, c, x_nhwc.dtype.itemsize, 4, n)
    assert h % tile_rows == 0
    th = tile_rows
    kernel = functools.partial(_bn_act_kernel, approx_gelu=approx_gelu)
    return pl.pallas_call(
        kernel,
        out_shape=jax.ShapeDtypeStruct((n, h, w, c), jnp.float32),
        grid=(n, h // th),
        in_specs=[
            pl.BlockSpec((1, c), lambda i, j: (0, 0)),
            pl.BlockSpec((1, c), lambda i, j: (0, 0)),
            pl.BlockSpec((1, th, w, c), lambda i, j: (i, j, 0, 0)),
        ],
        out_specs=pl.BlockSpec((1, th, w, c), lambda i, j: (i, j, 0, 0)),
        compiler_params=pltpu.CompilerParams(
            dimension_semantics=("parallel", "parallel"),
            vmem_limit_bytes=_vmem_limit_bytes()),
    )(scale.reshape(1, c).astype(jnp.float32),
      shift.reshape(1, c).astype(jnp.float32),
      x_nhwc)


# ---------------------------------------------------------------------------
# Module-level glue
# ---------------------------------------------------------------------------
def pixel_shuffle_nchw(x, r):
    """torch.nn.PixelShuffle semantics on an NCHW tensor."""
    n, c, h, w = x.shape
    co = c // (r * r)
    x = x.reshape(n, co, r, r, h, w)
    x = x.transpose(0, 1, 4, 2, 5, 3)
    return x.reshape(n, co, h * r, w * r)


def _bn_fold_from_stats(stats, gamma, beta, total_count):
    """Training-mode BatchNorm2d folded to scale/shift.

    Combines per-row-tile (sum, sum-of-squares) via per-tile mean-centred
    moments + Chan's parallel-variance formula to avoid the f32 cancellation
    of a global E[x^2]-E[x]^2.
    """
    n_img, ht = stats.shape[0], stats.shape[1]
    tile_count = total_count / (n_img * ht)
    s = stats[:, :, 0, :]
    q = stats[:, :, 1, :]
    mean_t = s / tile_count
    m2_t = jnp.maximum(q - s * mean_t, 0.0)
    mean = jnp.sum(s, axis=(0, 1)) / total_count
    dev = mean_t - mean[None, None, :]
    m2 = jnp.sum(m2_t, axis=(0, 1)) + tile_count * jnp.sum(dev * dev, axis=(0, 1))
    var = jnp.maximum(m2 / total_count, 0.0)
    scale = gamma * lax.rsqrt(var + _EPS)
    shift = beta - mean * scale
    return scale, shift


def ps_decoder_block(x_nchw, skip_nchw, params, upscale_factor=2,
                     tile_rows=None, approx_gelu=False):
    # TODO(synk): fuse PixelShuffle + skip-concat + NCHW->NHWC + bf16 cast into
    # conv1's input path, and the final NHWC->NCHW transpose into bn_act's
    # out_spec — both remain extra full HBM passes handled by XLA today.
    x = pixel_shuffle_nchw(x_nchw, upscale_factor)
    if skip_nchw is not None:
        x = jnp.concatenate([x, skip_nchw], axis=1)
    x = jnp.transpose(x, (0, 2, 3, 1)).astype(jnp.bfloat16)   # NHWC bf16 operands
    n, h, w, _ = x.shape
    count = n * h * w

    # conv1 (+ fused BN1 statistics); y1 kept bf16
    y1, st1 = conv3x3_bn_stats(x, params["w1"], out_dtype=jnp.bfloat16,
                               tile_rows=tile_rows, approx_gelu=approx_gelu)
    sc1, sh1 = _bn_fold_from_stats(st1, params["gamma1"], params["beta1"], count)

    # conv2 with BN1+GELU applied to its input inside the kernel (a1 never hits
    # HBM); y2 also stored bf16 (stats from the f32 accumulator).
    y2, st2 = conv3x3_bn_stats(y1, params["w2"], in_scale=sc1, in_shift=sh1,
                               out_dtype=jnp.bfloat16, tile_rows=tile_rows,
                               approx_gelu=approx_gelu)
    sc2, sh2 = _bn_fold_from_stats(st2, params["gamma2"], params["beta2"], count)

    a2 = bn_act(y2, sc2, sh2, tile_rows=tile_rows, approx_gelu=approx_gelu)
    return jnp.transpose(a2, (0, 3, 1, 2))                    # back to NCHW


def init_params(key, in_channels, out_channels, skip_connection=True,
                upscale_factor=2):
    conv_channels = in_channels // upscale_factor ** 2
    if skip_connection:
        conv_channels *= 2
    k1, k2, k3, k4 = jax.random.split(key, 4)
    fan = conv_channels * 9
    return {
        # weights stored as (kh, kw, Cin, Cout) for the NHWC kernels
        "w1": jax.random.normal(k1, (3, 3, conv_channels, conv_channels),
                                jnp.float32) * (2.0 / fan) ** 0.5,
        "gamma1": 1.0 + 0.1 * jax.random.normal(k2, (conv_channels,), jnp.float32),
        "beta1": 0.1 * jax.random.normal(k3, (conv_channels,), jnp.float32),
        "w2": jax.random.normal(k4, (3, 3, conv_channels, out_channels),
                                jnp.float32) * (2.0 / fan) ** 0.5,
        "gamma2": jnp.ones((out_channels,), jnp.float32),
        "beta2": jnp.zeros((out_channels,), jnp.float32),
    }


# ---------------------------------------------------------------------------
# Pure-JAX reference (lax.conv) mirroring the kernel's precision policy:
# bf16 MXU operands / f32 accumulation, bf16 y1 & y2 storage, f32 BN + GELU.
# ---------------------------------------------------------------------------
def reference_block(x_nchw, skip_nchw, params, upscale_factor=2):
    x = pixel_shuffle_nchw(x_nchw, upscale_factor)
    if skip_nchw is not None:
        x = jnp.concatenate([x, skip_nchw], axis=1)
    x = jnp.transpose(x, (0, 2, 3, 1)).astype(jnp.bfloat16)

    def conv(v, w):
        return lax.conv_general_dilated(
            v.astype(jnp.bfloat16), w.astype(jnp.bfloat16),
            window_strides=(1, 1), padding="SAME",
            dimension_numbers=("NHWC", "HWIO", "NHWC"),
            preferred_element_type=jnp.float32)

    def bn(y, gamma, beta):
        cnt = y.shape[0] * y.shape[1] * y.shape[2]
        mean = jnp.sum(y, axis=(0, 1, 2)) / cnt
        var = jnp.maximum(jnp.sum(y * y, axis=(0, 1, 2)) / cnt - mean * mean, 0.0)
        scale = gamma * lax.rsqrt(var + _EPS)
        return scale, beta - mean * scale

    y1 = conv(x, params["w1"])
    sc1, sh1 = bn(y1, params["gamma1"], params["beta1"])
    a1 = _gelu(y1.astype(jnp.bfloat16).astype(jnp.float32) * sc1 + sh1)
    y2 = conv(a1, params["w2"])
    sc2, sh2 = bn(y2, params["gamma2"], params["beta2"])
    a2 = _gelu(y2.astype(jnp.bfloat16).astype(jnp.float32) * sc2 + sh2)
    return jnp.transpose(a2, (0, 3, 1, 2))


if __name__ == "__main__":
    key = jax.random.PRNGKey(0)
    kx, ks, kp = jax.random.split(key, 3)

    in_channels, out_channels, r = 16, 8, 2
    N, H, W = 2, 8, 8                          # input (pre-upsample) spatial size
    x = jax.random.normal(kx, (N, in_channels, H, W), jnp.float32)           # NCHW
    skip = jax.random.normal(ks, (N, in_channels // (r * r), H * r, W * r),
                             jnp.float32)                                    # NCHW

    params = init_params(kp, in_channels, out_channels,
                         skip_connection=True, upscale_factor=r)

    # tile_rows=8 -> 2 row tiles per image, exercising both halo paths.
    out = ps_decoder_block(x, skip, params, upscale_factor=r, tile_rows=8)
    out = jax.block_until_ready(out)
    assert out.shape == (N, out_channels, H * r, W * r), out.shape
    assert bool(jnp.all(jnp.isfinite(out)))

    ref = jax.block_until_ready(reference_block(x, skip, params, upscale_factor=r))
    max_err = float(jnp.max(jnp.abs(out - ref)))
    assert jnp.allclose(out, ref, atol=1e-2, rtol=1e-2), f"max abs err={max_err}"
    print("KERNEL_OK")
</pallas_src>

<mosaic_0001>
module attributes {stable_mosaic.version = 11 : i64} {
  func.func @_conv_bn_kernel(%arg0: i32, %arg1: i32, %arg2: memref<1x8xf32, #tpu.memory_space<vmem>>, %arg3: memref<1x8xf32, #tpu.memory_space<vmem>>, %arg4: memref<1x8x16x8xbf16, #tpu.memory_space<vmem>>, %arg5: memref<1x1x16x8xbf16, #tpu.memory_space<vmem>>, %arg6: memref<1x1x16x8xbf16, #tpu.memory_space<vmem>>, %arg7: memref<3x24x8xbf16, #tpu.memory_space<vmem>>, %arg8: memref<1x8x16x8xbf16, #tpu.memory_space<vmem>>, %arg9: memref<1x1x2x8xf32, #tpu.memory_space<vmem>>, %arg10: memref<10x16x24xbf16, #tpu.memory_space<vmem>>) attributes {dimension_semantics = [#tpu.dimension_semantics<parallel>, #tpu.dimension_semantics<parallel>], iteration_bounds = array<i64: 2, 2>, scalar_prefetch = 0 : i64, scratch_operands = 1 : i64, tpu.core_type = #tpu.core_type<tc>, window_params = [{pipeline_mode = #tpu.pipeline_mode<synchronous>, transform_indices = @transform_0, window_bounds = array<i64: 1, 8>}, {pipeline_mode = #tpu.pipeline_mode<synchronous>, transform_indices = @transform_1, window_bounds = array<i64: 1, 8>}, {transform_indices = @transform_2, window_bounds = array<i64: 1, 8, 16, 8>}, {transform_indices = @transform_3, window_bounds = array<i64: 1, 1, 16, 8>}, {transform_indices = @transform_4, window_bounds = array<i64: 1, 1, 16, 8>}, {pipeline_mode = #tpu.pipeline_mode<synchronous>, transform_indices = @transform_5, window_bounds = array<i64: 3, 24, 8>}, {transform_indices = @transform_6, window_bounds = array<i64: 1, 8, 16, 8>}, {transform_indices = @transform_7, window_bounds = array<i64: 1, 1, 2, 8>}]} {
    %cst = arith.constant 0.000000e+00 : bf16
    %0 = vector.broadcast %cst : bf16 to vector<10x1x8xbf16>
    %c0 = arith.constant 0 : index
    %c0_0 = arith.constant 0 : index
    %c0_1 = arith.constant 0 : index
    %1 = vector.load %arg10[%c0, %c0_0, %c0_1] : memref<10x16x24xbf16, #tpu.memory_space<vmem>>, vector<10x1x8xbf16>
    tpu.vector_store %arg10[%c0, %c0_0, %c0_1], %0 {strides = array<i32>} : memref<10x16x24xbf16, #tpu.memory_space<vmem>>, vector<10x1x8xbf16>,
    %c0_2 = arith.constant 0 : index
    %c15 = arith.constant 15 : index
    %c16 = arith.constant 16 : index
    %2 = vector.load %arg10[%c0_2, %c15, %c16] : memref<10x16x24xbf16, #tpu.memory_space<vmem>>, vector<10x1x8xbf16>
    tpu.vector_store %arg10[%c0_2, %c15, %c16], %0 {strides = array<i32>} : memref<10x16x24xbf16, #tpu.memory_space<vmem>>, vector<10x1x8xbf16>,
    %c0_3 = arith.constant 0 : index
    %c0_4 = arith.constant 0 : index
    %c0_5 = arith.constant 0 : index
    %c0_6 = arith.constant 0 : index
    %3 = vector.load %arg4[%c0_3, %c0_4, %c0_5, %c0_6] : memref<1x8x16x8xbf16, #tpu.memory_space<vmem>>, vector<1x8x16x8xbf16>
    %4 = vector.shape_cast %3 : vector<1x8x16x8xbf16> to vector<8x16x8xbf16>
    %5 = arith.extf %4 : vector<8x16x8xbf16> to vector<8x16x8xf32>
    %6 = arith.truncf %5 : vector<8x16x8xf32> to vector<8x16x8xbf16>
    %c1 = arith.constant 1 : index
    %c0_7 = arith.constant 0 : index
    %c8 = arith.constant 8 : index
    %7 = vector.load %arg10[%c1, %c0_7, %c8] : memref<10x16x24xbf16, #tpu.memory_space<vmem>>, vector<8x16x8xbf16>
    tpu.vector_store %arg10[%c1, %c0_7, %c8], %6 {strides = array<i32>} : memref<10x16x24xbf16, #tpu.memory_space<vmem>>, vector<8x16x8xbf16>,
    %8 = vector.extract_strided_slice %6 {offsets = [0, 0, 0], sizes = [8, 15, 8], strides = [1, 1, 1]} : vector<8x16x8xbf16> to vector<8x15x8xbf16>
    %c1_8 = arith.constant 1 : index
    %c1_9 = arith.constant 1 : index
    %c0_10 = arith.constant 0 : index
    %9 = vector.load %arg10[%c1_8, %c1_9, %c0_10] : memref<10x16x24xbf16, #tpu.memory_space<vmem>>, vector<8x15x8xbf16>
    tpu.vector_store %arg10[%c1_8, %c1_9, %c0_10], %8 {strides = array<i32>} : memref<10x16x24xbf16, #tpu.memory_space<vmem>>, vector<8x15x8xbf16>,
    %10 = vector.extract_strided_slice %6 {offsets = [0, 1, 0], sizes = [8, 15, 8], strides = [1, 1, 1]} : vector<8x16x8xbf16> to vector<8x15x8xbf16>
    %c1_11 = arith.constant 1 : index
    %c0_12 = arith.constant 0 : index
    %c16_13 = arith.constant 16 : index
    %11 = vector.load %arg10[%c1_11, %c0_12, %c16_13] : memref<10x16x24xbf16, #tpu.memory_space<vmem>>, vector<8x15x8xbf16>
    tpu.vector_store %arg10[%c1_11, %c0_12, %c16_13], %10 {strides = array<i32>} : memref<10x16x24xbf16, #tpu.memory_space<vmem>>, vector<8x15x8xbf16>,
    %c0_i32 = arith.constant 0 : i32
    %12 = arith.cmpi eq, %arg1, %c0_i32 : i32
    %13 = arith.extui %12 : i1 to i32
    %c0_i32_14 = arith.constant 0 : i32
    %14 = arith.cmpi ne, %13, %c0_i32_14 : i32
    scf.if %14 {
      %cst_48 = arith.constant 0.000000e+00 : bf16
      %56 = vector.broadcast %cst_48 : bf16 to vector<1x16x24xbf16>
      %c0_49 = arith.constant 0 : index
      %c0_50 = arith.constant 0 : index
      %c0_51 = arith.constant 0 : index
      %57 = vector.load %arg10[%c0_49, %c0_50, %c0_51] : memref<10x16x24xbf16, #tpu.memory_space<vmem>>, vector<1x16x24xbf16>
      tpu.vector_store %arg10[%c0_49, %c0_50, %c0_51], %56 {strides = array<i32>} : memref<10x16x24xbf16, #tpu.memory_space<vmem>>, vector<1x16x24xbf16>,
    } else {
    }
    %c0_i32_15 = arith.constant 0 : i32
    %15 = arith.cmpi sgt, %arg1, %c0_i32_15 : i32
    %16 = arith.extui %15 : i1 to i32
    %c0_i32_16 = arith.constant 0 : i32
    %17 = arith.cmpi ne, %16, %c0_i32_16 : i32
    scf.if %17 {
      %c0_48 = arith.constant 0 : index
      %c0_49 = arith.constant 0 : index
      %c0_50 = arith.constant 0 : index
      %c0_51 = arith.constant 0 : index
      %56 = vector.load %arg5[%c0_48, %c0_49, %c0_50, %c0_51] : memref<1x1x16x8xbf16, #tpu.memory_space<vmem>>, vector<1x1x16x8xbf16>
      %57 = vector.shape_cast %56 : vector<1x1x16x8xbf16> to vector<1x16x8xbf16>
      %58 = arith.extf %57 : vector<1x16x8xbf16> to vector<1x16x8xf32>
      %59 = arith.truncf %58 : vector<1x16x8xf32> to vector<1x16x8xbf16>
      %c0_52 = arith.constant 0 : index
      %c0_53 = arith.constant 0 : index
      %c8_54 = arith.constant 8 : index
      %60 = vector.load %arg10[%c0_52, %c0_53, %c8_54] : memref<10x16x24xbf16, #tpu.memory_space<vmem>>, vector<1x16x8xbf16>
      tpu.vector_store %arg10[%c0_52, %c0_53, %c8_54], %59 {strides = array<i32>} : memref<10x16x24xbf16, #tpu.memory_space<vmem>>, vector<1x16x8xbf16>,
      %61 = vector.extract_strided_slice %59 {offsets = [0, 0, 0], sizes = [1, 15, 8], strides = [1, 1, 1]} : vector<1x16x8xbf16> to vector<1x15x8xbf16>
      %c0_55 = arith.constant 0 : index
      %c1_56 = arith.constant 1 : index
      %c0_57 = arith.constant 0 : index
      %62 = vector.load %arg10[%c0_55, %c1_56, %c0_57] : memref<10x16x24xbf16, #tpu.memory_space<vmem>>, vector<1x15x8xbf16>
      tpu.vector_store %arg10[%c0_55, %c1_56, %c0_57], %61 {strides = array<i32>} : memref<10x16x24xbf16, #tpu.memory_space<vmem>>, vector<1x15x8xbf16>,
      %63 = vector.extract_strided_slice %59 {offsets = [0, 1, 0], sizes = [1, 15, 8], strides = [1, 1, 1]} : vector<1x16x8xbf16> to vector<1x15x8xbf16>
      %c0_58 = arith.constant 0 : index
      %c0_59 = arith.constant 0 : index
      %c16_60 = arith.constant 16 : index
      %64 = vector.load %arg10[%c0_58, %c0_59, %c16_60] : memref<10x16x24xbf16, #tpu.memory_space<vmem>>, vector<1x15x8xbf16>
      tpu.vector_store %arg10[%c0_58, %c0_59, %c16_60], %63 {strides = array<i32>} : memref<10x16x24xbf16, #tpu.memory_space<vmem>>, vector<1x15x8xbf16>,
    } else {
    }
    %c1_i32 = arith.constant 1 : i32
    %18 = arith.cmpi eq, %arg1, %c1_i32 : i32
    %19 = arith.extui %18 : i1 to i32
    %c0_i32_17 = arith.constant 0 : i32
    %20 = arith.cmpi ne, %19, %c0_i32_17 : i32
    scf.if %20 {
      %cst_48 = arith.constant 0.000000e+00 : bf16
      %56 = vector.broadcast %cst_48 : bf16 to vector<1x16x24xbf16>
      %c9 = arith.constant 9 : index
      %c0_49 = arith.constant 0 : index
      %c0_50 = arith.constant 0 : index
      %57 = vector.load %arg10[%c9, %c0_49, %c0_50] : memref<10x16x24xbf16, #tpu.memory_space<vmem>>, vector<1x16x24xbf16>
      tpu.vector_store %arg10[%c9, %c0_49, %c0_50], %56 {strides = array<i32>} : memref<10x16x24xbf16, #tpu.memory_space<vmem>>, vector<1x16x24xbf16>,
    } else {
    }
    %c1_i32_18 = arith.constant 1 : i32
    %21 = arith.cmpi slt, %arg1, %c1_i32_18 : i32
    %22 = arith.extui %21 : i1 to i32
    %c0_i32_19 = arith.constant 0 : i32
    %23 = arith.cmpi ne, %22, %c0_i32_19 : i32
    scf.if %23 {
      %c0_48 = arith.constant 0 : index
      %c0_49 = arith.constant 0 : index
      %c0_50 = arith.constant 0 : index
      %c0_51 = arith.constant 0 : index
      %56 = vector.load %arg6[%c0_48, %c0_49, %c0_50, %c0_51] : memref<1x1x16x8xbf16, #tpu.memory_space<vmem>>, vector<1x1x16x8xbf16>
      %57 = vector.shape_cast %56 : vector<1x1x16x8xbf16> to vector<1x16x8xbf16>
      %58 = arith.extf %57 : vector<1x16x8xbf16> to vector<1x16x8xf32>
      %59 = arith.truncf %58 : vector<1x16x8xf32> to vector<1x16x8xbf16>
      %c9 = arith.constant 9 : index
      %c0_52 = arith.constant 0 : index
      %c8_53 = arith.constant 8 : index
      %60 = vector.load %arg10[%c9, %c0_52, %c8_53] : memref<10x16x24xbf16, #tpu.memory_space<vmem>>, vector<1x16x8xbf16>
      tpu.vector_store %arg10[%c9, %c0_52, %c8_53], %59 {strides = array<i32>} : memref<10x16x24xbf16, #tpu.memory_space<vmem>>, vector<1x16x8xbf16>,
      %61 = vector.extract_strided_slice %59 {offsets = [0, 0, 0], sizes = [1, 15, 8], strides = [1, 1, 1]} : vector<1x16x8xbf16> to vector<1x15x8xbf16>
      %c9_54 = arith.constant 9 : index
      %c1_55 = arith.constant 1 : index
      %c0_56 = arith.constant 0 : index
      %62 = vector.load %arg10[%c9_54, %c1_55, %c0_56] : memref<10x16x24xbf16, #tpu.memory_space<vmem>>, vector<1x15x8xbf16>
      tpu.vector_store %arg10[%c9_54, %c1_55, %c0_56], %61 {strides = array<i32>} : memref<10x16x24xbf16, #tpu.memory_space<vmem>>, vector<1x15x8xbf16>,
      %63 = vector.extract_strided_slice %59 {offsets = [0, 1, 0], sizes = [1, 15, 8], strides = [1, 1, 1]} : vector<1x16x8xbf16> to vector<1x15x8xbf16>
      %c9_57 = arith.constant 9 : index
      %c0_58 = arith.constant 0 : index
      %c16_59 = arith.constant 16 : index
      %64 = vector.load %arg10[%c9_57, %c0_58, %c16_59] : memref<10x16x24xbf16, #tpu.memory_space<vmem>>, vector<1x15x8xbf16>
      tpu.vector_store %arg10[%c9_57, %c0_58, %c16_59], %63 {strides = array<i32>} : memref<10x16x24xbf16, #tpu.memory_space<vmem>>, vector<1x15x8xbf16>,
    } else {
    }
    %c0_20 = arith.constant 0 : index
    %c0_21 = arith.constant 0 : index
    %c0_22 = arith.constant 0 : index
    %24 = vector.load %arg7[%c0_20, %c0_21, %c0_22] : memref<3x24x8xbf16, #tpu.memory_space<vmem>>, vector<3x24x8xbf16>
    %c0_23 = arith.constant 0 : index
    %c0_24 = arith.constant 0 : index
    %c0_25 = arith.constant 0 : index
    %25 = vector.load %arg10[%c0_23, %c0_24, %c0_25] : memref<10x16x24xbf16, #tpu.memory_space<vmem>>, vector<8x16x24xbf16>
    %26 = vector.shape_cast %25 : vector<8x16x24xbf16> to vector<128x24xbf16>
    %27 = vector.extract_strided_slice %24 {offsets = [0, 0, 0], sizes = [1, 24, 8], strides = [1, 1, 1]} : vector<3x24x8xbf16> to vector<1x24x8xbf16>
    %28 = vector.shape_cast %27 : vector<1x24x8xbf16> to vector<24x8xbf16>
    %cst_26 = arith.constant dense<0.000000e+00> : vector<128x8xf32>
    %29 = tpu.matmul %26, %28, %cst_26 {dimension_numbers = #tpu.dot_dimension_numbers<[1], [0], [0], [1], [0, 0, 1, 1], [], []>} : vector<128x24xbf16>, vector<24x8xbf16>, vector<128x8xf32> -> vector<128x8xf32>
    %c1_27 = arith.constant 1 : index
    %c0_28 = arith.constant 0 : index
    %c0_29 = arith.constant 0 : index
    %30 = vector.load %arg10[%c1_27, %c0_28, %c0_29] : memref<10x16x24xbf16, #tpu.memory_space<vmem>>, vector<8x16x24xbf16>
    %31 = vector.shape_cast %30 : vector<8x16x24xbf16> to vector<128x24xbf16>
    %32 = vector.extract_strided_slice %24 {offsets = [1, 0, 0], sizes = [1, 24, 8], strides = [1, 1, 1]} : vector<3x24x8xbf16> to vector<1x24x8xbf16>
    %33 = vector.shape_cast %32 : vector<1x24x8xbf16> to vector<24x8xbf16>
    %cst_30 = arith.constant dense<0.000000e+00> : vector<128x8xf32>
    %34 = tpu.matmul %31, %33, %cst_30 {dimension_numbers = #tpu.dot_dimension_numbers<[1], [0], [0], [1], [0, 0, 1, 1], [], []>} : vector<128x24xbf16>, vector<24x8xbf16>, vector<128x8xf32> -> vector<128x8xf32>
    %35 = arith.addf %29, %34 : vector<128x8xf32>
    %c2 = arith.constant 2 : index
    %c0_31 = arith.constant 0 : index
    %c0_32 = arith.constant 0 : index
    %36 = vector.load %arg10[%c2, %c0_31, %c0_32] : memref<10x16x24xbf16, #tpu.memory_space<vmem>>, vector<8x16x24xbf16>
    %37 = vector.shape_cast %36 : vector<8x16x24xbf16> to vector<128x24xbf16>
    %38 = vector.extract_strided_slice %24 {offsets = [2, 0, 0], sizes = [1, 24, 8], strides = [1, 1, 1]} : vector<3x24x8xbf16> to vector<1x24x8xbf16>
    %39 = vector.shape_cast %38 : vector<1x24x8xbf16> to vector<24x8xbf16>
    %cst_33 = arith.constant dense<0.000000e+00> : vector<128x8xf32>
    %40 = tpu.matmul %37, %39, %cst_33 {dimension_numbers = #tpu.dot_dimension_numbers<[1], [0], [0], [1], [0, 0, 1, 1], [], []>} : vector<128x24xbf16>, vector<24x8xbf16>, vector<128x8xf32> -> vector<128x8xf32>
    %41 = arith.addf %35, %40 : vector<128x8xf32>
    %42 = vector.shape_cast %41 : vector<128x8xf32> to vector<1x8x16x8xf32>
    %43 = arith.truncf %42 : vector<1x8x16x8xf32> to vector<1x8x16x8xbf16>
    %c0_34 = arith.constant 0 : index
    %c0_35 = arith.constant 0 : index
    %c0_36 = arith.constant 0 : index
    %c0_37 = arith.constant 0 : index
    %44 = vector.load %arg8[%c0_34, %c0_35, %c0_36, %c0_37] : memref<1x8x16x8xbf16, #tpu.memory_space<vmem>>, vector<1x8x16x8xbf16>
    tpu.vector_store %arg8[%c0_34, %c0_35, %c0_36, %c0_37], %43 {strides = array<i32>} : memref<1x8x16x8xbf16, #tpu.memory_space<vmem>>, vector<1x8x16x8xbf16>,
    %cst_38 = arith.constant dense<0.000000e+00> : vector<8xf32>
    %45 = vector.multi_reduction <add>, %41, %cst_38 [0] : vector<128x8xf32> to vector<8xf32>
    %46 = vector.shape_cast %45 : vector<8xf32> to vector<1x8xf32>
    %c0_39 = arith.constant 0 : index
    %c0_40 = arith.constant 0 : index
    %c0_41 = arith.constant 0 : index
    %c0_42 = arith.constant 0 : index
    %47 = vector.load %arg9[%c0_39, %c0_40, %c0_41, %c0_42] : memref<1x1x2x8xf32, #tpu.memory_space<vmem>>, vector<1x1x1x8xf32>
    %48 = vector.shape_cast %47 : vector<1x1x1x8xf32> to vector<1x8xf32>
    %49 = vector.shape_cast %46 : vector<1x8xf32> to vector<1x1x1x8xf32>
    tpu.vector_store %arg9[%c0_39, %c0_40, %c0_41, %c0_42], %49 {strides = array<i32>} : memref<1x1x2x8xf32, #tpu.memory_space<vmem>>, vector<1x1x1x8xf32>,
    %50 = arith.mulf %41, %41 : vector<128x8xf32>
    %cst_43 = arith.constant dense<0.000000e+00> : vector<8xf32>
    %51 = vector.multi_reduction <add>, %50, %cst_43 [0] : vector<128x8xf32> to vector<8xf32>
    %52 = vector.shape_cast %51 : vector<8xf32> to vector<1x8xf32>
    %c0_44 = arith.constant 0 : index
    %c0_45 = arith.constant 0 : index
    %c1_46 = arith.constant 1 : index
    %c0_47 = arith.constant 0 : index
    %53 = vector.load %arg9[%c0_44, %c0_45, %c1_46, %c0_47] : memref<1x1x2x8xf32, #tpu.memory_space<vmem>>, vector<1x1x1x8xf32>
    %54 = vector.shape_cast %53 : vector<1x1x1x8xf32> to vector<1x8xf32>
    %55 = vector.shape_cast %52 : vector<1x8xf32> to vector<1x1x1x8xf32>
    tpu.vector_store %arg9[%c0_44, %c0_45, %c1_46, %c0_47], %55 {strides = array<i32>} : memref<1x1x2x8xf32, #tpu.memory_space<vmem>>, vector<1x1x1x8xf32>,
    return
  }
  func.func @transform_0(%arg0: i32, %arg1: i32) -> (i32, i32) {
    %c0_i32 = arith.constant 0 : i32
    %c0_i32_0 = arith.constant 0 : i32
    %c0_i32_1 = arith.constant 0 : i32
    return %c0_i32, %c0_i32_0 : i32, i32
  }
  func.func @transform_1(%arg0: i32, %arg1: i32) -> (i32, i32) {
    %c0_i32 = arith.constant 0 : i32
    %c0_i32_0 = arith.constant 0 : i32
    %c0_i32_1 = arith.constant 0 : i32
    return %c0_i32, %c0_i32_0 : i32, i32
  }
  func.func @transform_2(%arg0: i32, %arg1: i32) -> (i32, i32, i32, i32) {
    %c0_i32 = arith.constant 0 : i32
    %c0_i32_0 = arith.constant 0 : i32
    %c0_i32_1 = arith.constant 0 : i32
    return %arg0, %arg1, %c0_i32, %c0_i32_0 : i32, i32, i32, i32
  }
  func.func @transform_3(%arg0: i32, %arg1: i32) -> (i32, i32, i32, i32) {
    %c8_i32 = arith.constant 8 : i32
    %0 = arith.muli %arg1, %c8_i32 : i32
    %c1_i32 = arith.constant 1 : i32
    %1 = arith.subi %0, %c1_i32 : i32
    %c0_i32 = arith.constant 0 : i32
    %2 = arith.maxsi %1, %c0_i32 : i32
    %c0_i32_0 = arith.constant 0 : i32
    %c0_i32_1 = arith.constant 0 : i32
    %c0_i32_2 = arith.constant 0 : i32
    return %arg0, %2, %c0_i32_0, %c0_i32_1 : i32, i32, i32, i32
  }
  func.func @transform_4(%arg0: i32, %arg1: i32) -> (i32, i32, i32, i32) {
    %c1_i32 = arith.constant 1 : i32
    %0 = arith.addi %arg1, %c1_i32 : i32
    %c8_i32 = arith.constant 8 : i32
    %1 = arith.muli %0, %c8_i32 : i32
    %c15_i32 = arith.constant 15 : i32
    %2 = arith.minsi %1, %c15_i32 : i32
    %c0_i32 = arith.constant 0 : i32
    %c0_i32_0 = arith.constant 0 : i32
    %c0_i32_1 = arith.constant 0 : i32
    return %arg0, %2, %c0_i32, %c0_i32_0 : i32, i32, i32, i32
  }
  func.func @transform_5(%arg0: i32, %arg1: i32) -> (i32, i32, i32) {
    %c0_i32 = arith.constant 0 : i32
    %c0_i32_0 = arith.constant 0 : i32
    %c0_i32_1 = arith.constant 0 : i32
    %c0_i32_2 = arith.constant 0 : i32
    return %c0_i32, %c0_i32_0, %c0_i32_1 : i32, i32, i32
  }
  func.func @transform_6(%arg0: i32, %arg1: i32) -> (i32, i32, i32, i32) {
    %c0_i32 = arith.constant 0 : i32
    %c0_i32_0 = arith.constant 0 : i32
    %c0_i32_1 = arith.constant 0 : i32
    return %arg0, %arg1, %c0_i32, %c0_i32_0 : i32, i32, i32, i32
  }
  func.func @transform_7(%arg0: i32, %arg1: i32) -> (i32, i32, i32, i32) {
    %c0_i32 = arith.constant 0 : i32
    %c0_i32_0 = arith.constant 0 : i32
    %c0_i32_1 = arith.constant 0 : i32
    return %arg0, %arg1, %c0_i32, %c0_i32_0 : i32, i32, i32, i32
  }
}

</mosaic_0001>

<llo_original>
// kernel: tpu_custom_call.1
$region0: #{tpu_custom_call.1}
  #allocation0 [shape = 'u32[]', space=smem, size = 0x4, offset = 0x4, fixed_abs, tag = 'smem constant byte address 0x4 - core index']
  #allocation1 [shape = 'u32[72,128]{1,0:T(1,128)}', space=vmem, size = 0x9000, scoped, tag = 'internal scratch']
  #allocation2 [shape = 'bf16[10,16,24]{2,1,0:T(8,128)(2,1)}', space=vmem, size = 0xa000, scoped, tag = 'scratch operand']
  %s0 = inlined_call_operand.vmem [shape: f32[1,8], index: 0, kind: input, shape index: {}]
  %s1 = inlined_call_operand.vmem [shape: f32[1,8], index: 1, kind: input, shape index: {}]
  %s2 = inlined_call_operand.vmem [shape: bf16[2,16,16,8], index: 2, kind: input, shape index: {}]
  %s3 = inlined_call_operand.vmem [shape: bf16[2,16,16,8], index: 3, kind: input, shape index: {}]
  %s4 = inlined_call_operand.vmem [shape: bf16[2,16,16,8], index: 4, kind: input, shape index: {}]
  %s5 = inlined_call_operand.vmem [shape: bf16[3,24,8], index: 5, kind: input, shape index: {}]
  %s6 = inlined_call_operand.vmem [shape: bf16[2,16,16,8], index: 6, kind: output, shape index: {0}]
  %s7 = inlined_call_operand.hbm [shape: f32[2,2,2,8], index: 7, kind: output, shape index: {1}]
  %8 = xla_tuple %s6, %s7
  %s9 = sld [smem:[#allocation0]]
  $region81: #{tpu_custom_call.1} parent=0
    _
  %s11 = ssub.s32 1, %s9
  %s12 = scalar_select 0, %s11, %s9
  $region1: #{tpu_custom_call.1} parent=0
    #allocation3 [shape = 'u8[2048]{0}', space=vmem, size = 0x800, scoped, tag = 'output window, operand 1']
    #allocation4 [shape = 's32[2]{0}', space=sflag, size = 0x8, scoped, tag = 'scoped memory for tpu_custom_call.1']
    %13 = vsyncpa [#allocation4], 0
    %s14 = scalar_lea.sflag [#allocation4], 1
    %15 = vsyncpa %s14, 0
    loop: start=0, step=1, limit=6
    $region2: #{tpu_custom_call.1} parent=1 // loop_pre_header
      _
    $region3: #{tpu_custom_call.1} parent=1 // loop_header
      %s17 = sphi 0, %s21
      %p18 = scmp.ge.s32.totalorder %s17, 6
      %s24 = sphi 0, %s36
      %s25 = sphi 0, %s32
      %s26 = sphi 0, %s24
      %s27 = sphi 0, %s25
      %s28 = sphi 0, %s26
      %s29 = sphi 0, %s27
      %s37 = sphi 0, %s37
      %s39 = sphi 0, %s37
      %s40 = sphi 0, %s39
      %s54 = sphi 0, %s40
      %s58 = sphi 0, %s58
      %s60 = sphi 0, %s58
      %s61 = sphi 0, %s60
      %s75 = sphi 0, %s61
      %s83 = sphi 0, %s85
      %s86 = sphi 0, %s83
      %s87 = sphi 0, %s86
      %s103 = sphi 0, %s87
      %s119 = sphi 0, %s121
      %s122 = sphi 0, %s119
      %s123 = sphi 0, %s122
      %s139 = sphi 0, %s123
      %s155 = sphi 0, %s157
      %s158 = sphi 0, %s155
      %s159 = sphi 0, %s158
      %s175 = sphi 0, %s159
      %s179 = sphi 0, %s179
      %s181 = sphi 0, %s179
      %s182 = sphi 0, %s181
      %s196 = sphi 0, %s182
      %s204 = sphi 0, %s206
      %s207 = sphi 0, %s204
      %s208 = sphi 0, %s207
      %s224 = sphi 0, %s208
      %s232 = sphi 0, %s234
      %s235 = sphi 0, %s232
      %s236 = sphi 0, %s235
      %s252 = sphi 0, %s236
    $region4: #{tpu_custom_call.1} parent=1 // loop_header_branch
      %20 = sbr.rel (%p18) target = $region8
    $region5: #{tpu_custom_call.1} parent=1 // loop_body
      %s22 = ssub.s32 %s17, 1
      %s23 = ssub.s32 %s17, 2
      %s30 = sadd.s32 1, %s25
      %p31 = scmp.ge.s32.totalorder %s30, 2
      %s32 = scalar_select %p31, 0, %s30
      %s33 = sadd.s32 1, %s24
      %s34 = scalar_select %p31, %s33, %s24
      %p35 = scmp.ge.s32.totalorder %s34, 2
      %s36 = scalar_select %p35, 0, %s34
      %s38 = sadd.s32 %s37, 1
      %p41 = scmp.eq.s32.totalorder %s17, 3
      %p42 = scmp.ne.s32.totalorder %s37, %s39
      %p43 = scmp.eq.s32.totalorder %s17, 0
      %p44 = por %p42, %p43
      %p45 = scmp.ne.s32.totalorder %s37, %s39
      %p46 = scmp.eq.s32.totalorder %s22, 3
      %p47 = por %p45, %p46
      %p48 = scmp.ne.s32.totalorder %s39, %s40
      %p49 = scmp.eq.s32.totalorder %s22, 0
      %p50 = por %p48, %p49
      %p51 = scmp.ne.s32.totalorder %s39, %s40
      %p52 = scmp.eq.s32.totalorder %s23, 3
      %p53 = por %p51, %p52
      %p55 = scmp.ne.s32.totalorder %s40, %s54
      %p56 = scmp.eq.s32.totalorder %s23, 0
      %p57 = por %p55, %p56
      %s59 = sadd.s32 %s58, 1
      %p62 = scmp.eq.s32.totalorder %s17, 3
      %p63 = scmp.ne.s32.totalorder %s58, %s60
      %p64 = scmp.eq.s32.totalorder %s17, 0
      %p65 = por %p63, %p64
      %p66 = scmp.ne.s32.totalorder %s58, %s60
      %p67 = scmp.eq.s32.totalorder %s22, 3
      %p68 = por %p66, %p67
      %p69 = scmp.ne.s32.totalorder %s60, %s61
      %p70 = scmp.eq.s32.totalorder %s22, 0
      %p71 = por %p69, %p70
      %p72 = scmp.ne.s32.totalorder %s60, %s61
      %p73 = scmp.eq.s32.totalorder %s23, 3
      %p74 = por %p72, %p73
      %p76 = scmp.ne.s32.totalorder %s61, %s75
      %p77 = scmp.eq.s32.totalorder %s23, 0
      %p78 = por %p76, %p77
      %s79 = ssub.s32 %s24, %s36
      %s80 = ssub.s32 %s25, %s32
      %s81 = sor.u32 %s79, %s80
      %p82 = scmp.eq.s32.totalorder %s81, 0
      %s84 = sadd.s32 %s83, 1
      %s85 = scalar_select %p82, %s83, %s84
      %p88 = pneg %p82
      %p89 = scmp.eq.s32.totalorder %s17, 3
      %p90 = por %p88, %p89
      %p91 = scmp.ne.s32.totalorder %s83, %s86
      %p92 = scmp.eq.s32.totalorder %s17, 0
      %p93 = por %p91, %p92
      %p94 = scmp.ne.s32.totalorder %s83, %s86
      %p95 = scmp.eq.s32.totalorder %s22, 3
      %p96 = por %p94, %p95
      %p97 = scmp.ne.s32.totalorder %s86, %s87
      %p98 = scmp.eq.s32.totalorder %s22, 0
      %p99 = por %p97, %p98
      %p100 = scmp.ne.s32.totalorder %s86, %s87
      %p101 = scmp.eq.s32.totalorder %s23, 3
      %p102 = por %p100, %p101
      %p104 = scmp.ne.s32.totalorder %s87, %s103
      %p105 = scmp.eq.s32.totalorder %s23, 0
      %p106 = por %p104, %p105
      %s107 = smul.u32 %s25, 8
      %s108 = ssub.s32 %s107, 1
      %p109 = scmp.gt.s32.totalorder %s108, 0
      %s110 = scalar_select %p109, %s108, 0
      %s111 = smul.u32 %s32, 8
      %s112 = ssub.s32 %s111, 1
      %p113 = scmp.gt.s32.totalorder %s112, 0
      %s114 = scalar_select %p113, %s112, 0
      %s115 = ssub.s32 %s24, %s36
      %s116 = ssub.s32 %s110, %s114
      %s117 = sor.u32 %s115, %s116
      %p118 = scmp.eq.s32.totalorder %s117, 0
      %s120 = sadd.s32 %s119, 1
      %s121 = scalar_select %p118, %s119, %s120
      %p124 = pneg %p118
      %p125 = scmp.eq.s32.totalorder %s17, 3
      %p126 = por %p124, %p125
      %p127 = scmp.ne.s32.totalorder %s119, %s122
      %p128 = scmp.eq.s32.totalorder %s17, 0
      %p129 = por %p127, %p128
      %p130 = scmp.ne.s32.totalorder %s119, %s122
      %p131 = scmp.eq.s32.totalorder %s22, 3
      %p132 = por %p130, %p131
      %p133 = scmp.ne.s32.totalorder %s122, %s123
      %p134 = scmp.eq.s32.totalorder %s22, 0
      %p135 = por %p133, %p134
      %p136 = scmp.ne.s32.totalorder %s122, %s123
      %p137 = scmp.eq.s32.totalorder %s23, 3
      %p138 = por %p136, %p137
      %p140 = scmp.ne.s32.totalorder %s123, %s139
      %p141 = scmp.eq.s32.totalorder %s23, 0
      %p142 = por %p140, %p141
      %s143 = sadd.s32 %s25, 1
      %s144 = smul.u32 %s143, 8
      %p145 = scmp.lt.s32.totalorder %s144, 15
      %s146 = scalar_select %p145, %s144, 15
      %s147 = sadd.s32 %s32, 1
      %s148 = smul.u32 %s147, 8
      %p149 = scmp.lt.s32.totalorder %s148, 15
      %s150 = scalar_select %p149, %s148, 15
      %s151 = ssub.s32 %s24, %s36
      %s152 = ssub.s32 %s146, %s150
      %s153 = sor.u32 %s151, %s152
      %p154 = scmp.eq.s32.totalorder %s153, 0
      %s156 = sadd.s32 %s155, 1
      %s157 = scalar_select %p154, %s155, %s156
      %p160 = pneg %p154
      %p161 = scmp.eq.s32.totalorder %s17, 3
      %p162 = por %p160, %p161
      %p163 = scmp.ne.s32.totalorder %s155, %s158
      %p164 = scmp.eq.s32.totalorder %s17, 0
      %p165 = por %p163, %p164
      %p166 = scmp.ne.s32.totalorder %s155, %s158
      %p167 = scmp.eq.s32.totalorder %s22, 3
      %p168 = por %p166, %p167
      %p169 = scmp.ne.s32.totalorder %s158, %s159
      %p170 = scmp.eq.s32.totalorder %s22, 0
      %p171 = por %p169, %p170
      %p172 = scmp.ne.s32.totalorder %s158, %s159
      %p173 = scmp.eq.s32.totalorder %s23, 3
      %p174 = por %p172, %p173
      %p176 = scmp.ne.s32.totalorder %s159, %s175
      %p177 = scmp.eq.s32.totalorder %s23, 0
      %p178 = por %p176, %p177
      %s180 = sadd.s32 %s179, 1
      %p183 = scmp.eq.s32.totalorder %s17, 3
      %p184 = scmp.ne.s32.totalorder %s179, %s181
      %p185 = scmp.eq.s32.totalorder %s17, 0
      %p186 = por %p184, %p185
      %p187 = scmp.ne.s32.totalorder %s179, %s181
      %p188 = scmp.eq.s32.totalorder %s22, 3
      %p189 = por %p187, %p188
      %p190 = scmp.ne.s32.totalorder %s181, %s182
      %p191 = scmp.eq.s32.totalorder %s22, 0
      %p192 = por %p190, %p191
      %p193 = scmp.ne.s32.totalorder %s181, %s182
      %p194 = scmp.eq.s32.totalorder %s23, 3
      %p195 = por %p193, %p194
      %p197 = scmp.ne.s32.totalorder %s182, %s196
      %p198 = scmp.eq.s32.totalorder %s23, 0
      %p199 = por %p197, %p198
      %s200 = ssub.s32 %s24, %s36
      %s201 = ssub.s32 %s25, %s32
      %s202 = sor.u32 %s200, %s201
      %p203 = scmp.eq.s32.totalorder %s202, 0
      %s205 = sadd.s32 %s204, 1
      %s206 = scalar_select %p203, %s204, %s205
      %p209 = pneg %p203
      %p210 = scmp.eq.s32.totalorder %s17, 3
      %p211 = por %p209, %p210
      %p212 = scmp.ne.s32.totalorder %s204, %s207
      %p213 = scmp.eq.s32.totalorder %s17, 0
      %p214 = por %p212, %p213
      %p215 = scmp.ne.s32.totalorder %s204, %s207
      %p216 = scmp.eq.s32.totalorder %s22, 3
      %p217 = por %p215, %p216
      %p218 = scmp.ne.s32.totalorder %s207, %s208
      %p219 = scmp.eq.s32.totalorder %s22, 0
      %p220 = por %p218, %p219
      %p221 = scmp.ne.s32.totalorder %s207, %s208
      %p222 = scmp.eq.s32.totalorder %s23, 3
      %p223 = por %p221, %p222
      %p225 = scmp.ne.s32.totalorder %s208, %s224
      %p226 = scmp.eq.s32.totalorder %s23, 0
      %p227 = por %p225, %p226
      %s228 = ssub.s32 %s24, %s36
      %s229 = ssub.s32 %s25, %s32
      %s230 = sor.u32 %s228, %s229
      %p231 = scmp.eq.s32.totalorder %s230, 0
      %s233 = sadd.s32 %s232, 1
      %s234 = scalar_select %p231, %s232, %s233
      %p237 = pneg %p231
      %p238 = scmp.eq.s32.totalorder %s17, 3
      %p239 = por %p237, %p238
      %p240 = scmp.ne.s32.totalorder %s232, %s235
      %p241 = scmp.eq.s32.totalorder %s17, 0
      %p242 = por %p240, %p241
      %p243 = scmp.ne.s32.totalorder %s232, %s235
      %p244 = scmp.eq.s32.totalorder %s22, 3
      %p245 = por %p243, %p244
      %p246 = scmp.ne.s32.totalorder %s235, %s236
      %p247 = scmp.eq.s32.totalorder %s22, 0
      %p248 = por %p246, %p247
      %p249 = scmp.ne.s32.totalorder %s235, %s236
      %p250 = scmp.eq.s32.totalorder %s23, 3
      %p251 = por %p249, %p250
      %p253 = scmp.ne.s32.totalorder %s236, %s252
      %p254 = scmp.eq.s32.totalorder %s23, 0
      %p255 = por %p253, %p254
      %p256 = scmp.le.s32.totalorder 1, %s17
      %p257 = scmp.lt.s32.totalorder %s17, 5
      %p258 = pnand %p256, %p257
      %p259 = pneg %p258
      // Predicated region
      $region9: #{tpu_custom_call.1} parent=5 // pred_check
        _
      $region10: #{tpu_custom_call.1} parent=5 // pred_check_branch
        %261 = sbr.rel (%p258) target = $region12
      $region11: #{tpu_custom_call.1} parent=5 // pred_region
        %s262 = ssub.s32 %s17, 1
        // Predicated region
        $region13: #{tpu_custom_call.1} parent=11 // pred_check
          %p263 = pneg %p50
        $region14: #{tpu_custom_call.1} parent=11 // pred_check_branch
          %265 = sbr.rel (%p263) target = $region16
        $region15: #{tpu_custom_call.1} parent=11 // pred_region
          _
        $region16: #{tpu_custom_call.1} parent=11 // pred_fallthru
          _
        // Predicated region
        $region17: #{tpu_custom_call.1} parent=11 // pred_check
          %p266 = pneg %p71
        $region18: #{tpu_custom_call.1} parent=11 // pred_check_branch
          %268 = sbr.rel (%p266) target = $region20
        $region19: #{tpu_custom_call.1} parent=11 // pred_region
          _
        $region20: #{tpu_custom_call.1} parent=11 // pred_fallthru
          _
        // Predicated region
        $region21: #{tpu_custom_call.1} parent=11 // pred_check
          %p269 = pneg %p192
        $region22: #{tpu_custom_call.1} parent=11 // pred_check_branch
          %271 = sbr.rel (%p269) target = $region24
        $region23: #{tpu_custom_call.1} parent=11 // pred_region
          _
        $region24: #{tpu_custom_call.1} parent=11 // pred_fallthru
          _
      $region12: #{tpu_custom_call.1} parent=5 // pred_fallthru
        _
      %p272 = scmp.lt.s32.totalorder %s17, 4
      // Predicated region
      $region25: #{tpu_custom_call.1} parent=5 // pred_check
        %p273 = pneg %p272
      $region26: #{tpu_custom_call.1} parent=5 // pred_check_branch
        %275 = sbr.rel (%p273) target = $region28
      $region27: #{tpu_custom_call.1} parent=5 // pred_region
        // Predicated region
        $region29: #{tpu_custom_call.1} parent=27 // pred_check
          %p276 = pneg %p93
        $region30: #{tpu_custom_call.1} parent=27 // pred_check_branch
          %278 = sbr.rel (%p276) target = $region32
        $region31: #{tpu_custom_call.1} parent=27 // pred_region
          %s279 = smul.u32 8, %s25
          %p280 = scmp.lt.s32.totalorder %s24, 1
          %s281 = scalar_select %p280, %s24, 1
          %p282 = scmp.lt.s32.totalorder %s279, 15
          %s283 = scalar_select %p282, %s279, 15
          %s284 = smul.addr %s283, 2
          %s285 = smul.addr %s281, 32
          %s286 = sadd.s32 %s284, %s285
          %s287 = smul.addr %s286, 4
          %s288 = scalar_lea.vmem %s2, %s287
          %s289 = smul.u32 8, %s25
        $region32: #{tpu_custom_call.1} parent=27 // pred_fallthru
          _
        // Predicated region
        $region33: #{tpu_custom_call.1} parent=27 // pred_check
          %p290 = pneg %p129
        $region34: #{tpu_custom_call.1} parent=27 // pred_check_branch
          %292 = sbr.rel (%p290) target = $region36
        $region35: #{tpu_custom_call.1} parent=27 // pred_region
          %s293 = smul.u32 %s25, 8
          %s294 = ssub.s32 %s293, 1
          %p295 = scmp.gt.s32.totalorder %s294, 0
          %s296 = scalar_select %p295, %s294, 0
          %p297 = scmp.lt.s32.totalorder %s24, 1
          %s298 = scalar_select %p297, %s24, 1
          %p299 = scmp.lt.s32.totalorder %s296, 15
          %s300 = scalar_select %p299, %s296, 15
          %s301 = smul.addr %s300, 2
          %s302 = smul.addr %s298, 32
          %s303 = sadd.s32 %s301, %s302
          %s304 = smul.addr %s303, 4
          %s305 = scalar_lea.vmem %s3, %s304
          %s306 = smul.u32 %s25, 8
          %s307 = ssub.s32 %s306, 1
          %p308 = scmp.gt.s32.totalorder %s307, 0
          %s309 = scalar_select %p308, %s307, 0
        $region36: #{tpu_custom_call.1} parent=27 // pred_fallthru
          _
        // Predicated region
        $region37: #{tpu_custom_call.1} parent=27 // pred_check
          %p310 = pneg %p165
        $region38: #{tpu_custom_call.1} parent=27 // pred_check_branch
          %312 = sbr.rel (%p310) target = $region40
        $region39: #{tpu_custom_call.1} parent=27 // pred_region
          %s313 = sadd.s32 %s25, 1
          %s314 = smul.u32 %s313, 8
          %p315 = scmp.lt.s32.totalorder %s314, 15
          %s316 = scalar_select %p315, %s314, 15
          %p317 = scmp.lt.s32.totalorder %s24, 1
          %s318 = scalar_select %p317, %s24, 1
          %p319 = scmp.lt.s32.totalorder %s316, 15
          %s320 = scalar_select %p319, %s316, 15
          %s321 = smul.addr %s320, 2
          %s322 = smul.addr %s318, 32
          %s323 = sadd.s32 %s321, %s322
          %s324 = smul.addr %s323, 4
          %s325 = scalar_lea.vmem %s4, %s324
          %s326 = sadd.s32 %s25, 1
          %s327 = smul.u32 %s326, 8
          %p328 = scmp.lt.s32.totalorder %s327, 15
          %s329 = scalar_select %p328, %s327, 15
        $region40: #{tpu_custom_call.1} parent=27 // pred_fallthru
          _
      $region28: #{tpu_custom_call.1} parent=5 // pred_fallthru
        _
      %p330 = scmp.le.s32.totalorder 1, %s17
      %p331 = scmp.lt.s32.totalorder %s17, 5
      %p332 = pnand %p330, %p331
      %p333 = pneg %p332
      // Predicated region
      $region41: #{tpu_custom_call.1} parent=5 // pred_check
        _
      $region42: #{tpu_custom_call.1} parent=5 // pred_check_branch
        %335 = sbr.rel (%p332) target = $region44
      $region43: #{tpu_custom_call.1} parent=5 // pred_region
        %s336 = ssub.s32 %s17, 1
        %p337 = pneg %p50
        %p338 = pneg %p47
        %p339 = pneg %p71
        %p340 = pneg %p68
        %s341 = smul.u32 8, %s27
        %p342 = scmp.lt.s32.totalorder %s26, 1
        %s343 = scalar_select %p342, %s26, 1
        %p344 = scmp.lt.s32.totalorder %s341, 15
        %s345 = scalar_select %p344, %s341, 15
        %s346 = smul.addr %s345, 2
        %s347 = smul.addr %s343, 32
        %s348 = sadd.s32 %s346, %s347
        %s349 = smul.addr %s348, 4
        %s350 = scalar_lea.vmem %s2, %s349
        %p351 = pneg %p99
        %p352 = pneg %p96
        %s353 = smul.u32 %s27, 8
        %s354 = ssub.s32 %s353, 1
        %p355 = scmp.gt.s32.totalorder %s354, 0
        %s356 = scalar_select %p355, %s354, 0
        %p357 = scmp.lt.s32.totalorder %s26, 1
        %s358 = scalar_select %p357, %s26, 1
        %p359 = scmp.lt.s32.totalorder %s356, 15
        %s360 = scalar_select %p359, %s356, 15
        %s361 = smul.addr %s360, 2
        %s362 = smul.addr %s358, 32
        %s363 = sadd.s32 %s361, %s362
        %s364 = smul.addr %s363, 4
        %s365 = scalar_lea.vmem %s3, %s364
        %p366 = pneg %p135
        %p367 = pneg %p132
        %s368 = sadd.s32 %s27, 1
        %s369 = smul.u32 %s368, 8
        %p370 = scmp.lt.s32.totalorder %s369, 15
        %s371 = scalar_select %p370, %s369, 15
        %p372 = scmp.lt.s32.totalorder %s26, 1
        %s373 = scalar_select %p372, %s26, 1
        %p374 = scmp.lt.s32.totalorder %s371, 15
        %s375 = scalar_select %p374, %s371, 15
        %s376 = smul.addr %s375, 2
        %s377 = smul.addr %s373, 32
        %s378 = sadd.s32 %s376, %s377
        %s379 = smul.addr %s378, 4
        %s380 = scalar_lea.vmem %s4, %s379
        %p381 = pneg %p171
        %p382 = pneg %p168
        %p383 = pneg %p192
        %p384 = pneg %p189
        %p385 = pneg %p220
        %p386 = pneg %p217
        %s387 = smul.u32 8, %s27
        %p388 = scmp.lt.s32.totalorder %s26, 1
        %s389 = scalar_select %p388, %s26, 1
        %p390 = scmp.lt.s32.totalorder %s387, 15
        %s391 = scalar_select %p390, %s387, 15
        %s392 = smul.addr %s391, 2
        %s393 = smul.addr %s389, 32
        %s394 = sadd.s32 %s392, %s393
        %s395 = smul.addr %s394, 4
        %s396 = scalar_lea.vmem %s6, %s395
        %p397 = pneg %p248
        %p398 = pneg %p245
        %s399 = sand.u32 %s235, 1
        %s400 = scalar_lea.sflag [#allocation4], %s399
        %s401 = sand.u32 %s235, 1
        %s402 = smul.addr %s401, 2
        %s403 = scalar_lea.vmem [#allocation3], %s402
        %s404 = smul.u32 8, %s27
        %p405 = scmp.lt.s32.totalorder %s26, 1
        %s406 = scalar_select %p405, %s26, 1
        %p407 = scmp.lt.s32.totalorder %s404, 15
        %s408 = scalar_select %p407, %s404, 15
        %s409 = smul.addr %s408, 2
        %s410 = smul.addr %s406, 32
        %s411 = sadd.s32 %s409, %s410
        %s412 = smul.addr %s411, 4
        %s413 = scalar_lea.vmem %s2, %s412
        %s414 = smul.u32 8, %s27
        %s415 = smul.u32 %s27, 8
        %s416 = ssub.s32 %s415, 1
        %p417 = scmp.gt.s32.totalorder %s416, 0
        %s418 = scalar_select %p417, %s416, 0
        %p419 = scmp.lt.s32.totalorder %s26, 1
        %s420 = scalar_select %p419, %s26, 1
        %p421 = scmp.lt.s32.totalorder %s418, 15
        %s422 = scalar_select %p421, %s418, 15
        %s423 = smul.addr %s422, 2
        %s424 = smul.addr %s420, 32
        %s425 = sadd.s32 %s423, %s424
        %s426 = smul.addr %s425, 4
        %s427 = scalar_lea.vmem %s3, %s426
        %s428 = smul.u32 %s27, 8
        %s429 = ssub.s32 %s428, 1
        %p430 = scmp.gt.s32.totalorder %s429, 0
        %s431 = scalar_select %p430, %s429, 0
        %s432 = sadd.s32 %s27, 1
        %s433 = smul.u32 %s432, 8
        %p434 = scmp.lt.s32.totalorder %s433, 15
        %s435 = scalar_select %p434, %s433, 15
        %p436 = scmp.lt.s32.totalorder %s26, 1
        %s437 = scalar_select %p436, %s26, 1
        %p438 = scmp.lt.s32.totalorder %s435, 15
        %s439 = scalar_select %p438, %s435, 15
        %s440 = smul.addr %s439, 2
        %s441 = smul.addr %s437, 32
        %s442 = sadd.s32 %s440, %s441
        %s443 = smul.addr %s442, 4
        %s444 = scalar_lea.vmem %s4, %s443
        %s445 = sadd.s32 %s27, 1
        %s446 = smul.u32 %s445, 8
        %p447 = scmp.lt.s32.totalorder %s446, 15
        %s448 = scalar_select %p447, %s446, 15
        %s449 = smul.u32 8, %s27
        %p450 = scmp.lt.s32.totalorder %s26, 1
        %s451 = scalar_select %p450, %s26, 1
        %p452 = scmp.lt.s32.totalorder %s449, 15
        %s453 = scalar_select %p452, %s449, 15
        %s454 = smul.addr %s453, 2
        %s455 = smul.addr %s451, 32
        %s456 = sadd.s32 %s454, %s455
        %s457 = smul.addr %s456, 4
        %s458 = scalar_lea.vmem %s6, %s457
        %s459 = smul.u32 8, %s27
        %vm461 = vcmask 57344
        %vm462 = vsmask.f32 256
        %vm463 = vmand %vm461, %vm462
        %v464 = vld [vmem:[#allocation2] sm:$0x1]
        %v465 = vsel %vm463, 0, %v464
        %466 = vst [vmem:[#allocation2] sm:$0x1] %v465
        %v467 = vld [vmem:[#allocation2 + $0x8] sm:$0x1]
        %v468 = vsel %vm463, 0, %v467
        %469 = vst [vmem:[#allocation2 + $0x8] sm:$0x1] %v468
        %v470 = vld [vmem:[#allocation2 + $0x10] sm:$0x1]
        %v471 = vsel %vm463, 0, %v470
        %472 = vst [vmem:[#allocation2 + $0x10] sm:$0x1] %v471
        %v473 = vld [vmem:[#allocation2 + $0x18] sm:$0x1]
        %v474 = vsel %vm463, 0, %v473
        %475 = vst [vmem:[#allocation2 + $0x18] sm:$0x1] %v474
        %v476 = vld [vmem:[#allocation2 + $0x20] sm:$0x1]
        %v477 = vsel %vm463, 0, %v476
        %478 = vst [vmem:[#allocation2 + $0x20] sm:$0x1] %v477
        %v479 = vld [vmem:[#allocation2 + $0x28] sm:$0x1]
        %v480 = vsel %vm463, 0, %v479
        %481 = vst [vmem:[#allocation2 + $0x28] sm:$0x1] %v480
        %v482 = vld [vmem:[#allocation2 + $0x30] sm:$0x1]
        %v483 = vsel %vm463, 0, %v482
        %484 = vst [vmem:[#allocation2 + $0x30] sm:$0x1] %v483
        %v485 = vld [vmem:[#allocation2 + $0x38] sm:$0x1]
        %v486 = vsel %vm463, 0, %v485
        %487 = vst [vmem:[#allocation2 + $0x38] sm:$0x1] %v486
        %v488 = vld [vmem:[#allocation2 + $0x40] sm:$0x1]
        %v489 = vsel %vm463, 0, %v488
        %490 = vst [vmem:[#allocation2 + $0x40] sm:$0x1] %v489
        %v491 = vld [vmem:[#allocation2 + $0x48] sm:$0x1]
        %v492 = vsel %vm463, 0, %v491
        %493 = vst [vmem:[#allocation2 + $0x48] sm:$0x1] %v492
        %vm494 = vcmask 191619
        %vm495 = vsmask.f32 7950
        %vm496 = vmand %vm494, %vm495
        %v497 = vld [vmem:[#allocation2 + $0x4] sm:$0x8]
        %v498 = vsel %vm496, 0, %v497
        %499 = vst [vmem:[#allocation2 + $0x4] sm:$0x8] %v498
        %v500 = vld [vmem:[#allocation2 + $0xc] sm:$0x8]
        %v501 = vsel %vm496, 0, %v500
        %502 = vst [vmem:[#allocation2 + $0xc] sm:$0x8] %v501
        %v503 = vld [vmem:[#allocation2 + $0x14] sm:$0x8]
        %v504 = vsel %vm496, 0, %v503
        %505 = vst [vmem:[#allocation2 + $0x14] sm:$0x8] %v504
        %v506 = vld [vmem:[#allocation2 + $0x1c] sm:$0x8]
        %v507 = vsel %vm496, 0, %v506
        %508 = vst [vmem:[#allocation2 + $0x1c] sm:$0x8] %v507
        %v509 = vld [vmem:[#allocation2 + $0x24] sm:$0x8]
        %v510 = vsel %vm496, 0, %v509
        %511 = vst [vmem:[#allocation2 + $0x24] sm:$0x8] %v510
        %v512 = vld [vmem:[#allocation2 + $0x2c] sm:$0x8]
        %v513 = vsel %vm496, 0, %v512
        %514 = vst [vmem:[#allocation2 + $0x2c] sm:$0x8] %v513
        %v515 = vld [vmem:[#allocation2 + $0x34] sm:$0x8]
        %v516 = vsel %vm496, 0, %v515
        %517 = vst [vmem:[#allocation2 + $0x34] sm:$0x8] %v516
        %v518 = vld [vmem:[#allocation2 + $0x3c] sm:$0x8]
        %v519 = vsel %vm496, 0, %v518
        %520 = vst [vmem:[#allocation2 + $0x3c] sm:$0x8] %v519
        %v521 = vld [vmem:[#allocation2 + $0x44] sm:$0x8]
        %v522 = vsel %vm496, 0, %v521
        %523 = vst [vmem:[#allocation2 + $0x44] sm:$0x8] %v522
        %v524 = vld [vmem:[#allocation2 + $0x4c] sm:$0x8]
        %v525 = vsel %vm496, 0, %v524
        %526 = vst [vmem:[#allocation2 + $0x4c] sm:$0x8] %v525
        %v527 = vld [vmem:[%s413] sm:$0xf]
        %v528 = vld [vmem:[%s413 + $0x4] sm:$0xf]
        %v529 = vld [vmem:[%s413 + $0x8] sm:$0xf]
        %v530 = vld [vmem:[%s413 + $0xc] sm:$0xf]
        %v531 = vld [vmem:[%s413 + $0x10] sm:$0xf]
        %v532 = vld [vmem:[%s413 + $0x14] sm:$0xf]
        %v533 = vld [vmem:[%s413 + $0x18] sm:$0xf]
        %v534 = vld [vmem:[%s413 + $0x1c] sm:$0xf]
        %v535 = vld [vmem:[%s413 + $0x20] sm:$0xf]
        %v536 = vld [vmem:[%s413 + $0x24] sm:$0xf]
        %v537 = vld [vmem:[%s413 + $0x28] sm:$0xf]
        %v538 = vld [vmem:[%s413 + $0x2c] sm:$0xf]
        %v539 = vld [vmem:[%s413 + $0x30] sm:$0xf]
        %v540 = vld [vmem:[%s413 + $0x34] sm:$0xf]
        %v541 = vld [vmem:[%s413 + $0x38] sm:$0xf]
        %v542 = vld [vmem:[%s413 + $0x3c] sm:$0xf]
        %559 = vrot.lane.b32.xlu0 %v527, 8
        %v560 = vpop.permute.xlu0 %559
        %561 = vrot.lane.b32.xlu0 %v528, 8
        %v562 = vpop.permute.xlu0 %561
        %563 = vrot.lane.b32.xlu0 %v529, 8
        %v564 = vpop.permute.xlu0 %563
        %565 = vrot.lane.b32.xlu0 %v530, 8
        %v566 = vpop.permute.xlu0 %565
        %567 = vrot.lane.b32.xlu0 %v531, 8
        %v568 = vpop.permute.xlu0 %567
        %569 = vrot.lane.b32.xlu0 %v532, 8
        %v570 = vpop.permute.xlu0 %569
        %571 = vrot.lane.b32.xlu0 %v533, 8
        %v572 = vpop.permute.xlu0 %571
        %573 = vrot.lane.b32.xlu0 %v534, 8
        %v574 = vpop.permute.xlu0 %573
        %575 = vrot.lane.b32.xlu0 %v535, 8
        %v576 = vpop.permute.xlu0 %575
        %577 = vrot.lane.b32.xlu0 %v536, 8
        %v578 = vpop.permute.xlu0 %577
        %579 = vrot.lane.b32.xlu0 %v537, 8
        %v580 = vpop.permute.xlu0 %579
        %581 = vrot.lane.b32.xlu0 %v538, 8
        %v582 = vpop.permute.xlu0 %581
        %583 = vrot.lane.b32.xlu0 %v539, 8
        %v584 = vpop.permute.xlu0 %583
        %585 = vrot.lane.b32.xlu0 %v540, 8
        %v586 = vpop.permute.xlu0 %585
        %587 = vrot.lane.b32.xlu0 %v541, 8
        %v588 = vpop.permute.xlu0 %587
        %589 = vrot.lane.b32.xlu0 %v542, 8
        %v590 = vpop.permute.xlu0 %589
        %s607 = scalar_lea.vmem [#allocation2], 8
        %vm608 = vcmask 126016
        %609 = vst.msk [vmem:[%s607] sm:$0xf] %vm608, %v560
        %610 = vst.msk [vmem:[%s607 + $0x4] sm:$0xf] %vm608, %v562
        %611 = vst.msk [vmem:[%s607 + $0x8] sm:$0xf] %vm608, %v564
        %612 = vst.msk [vmem:[%s607 + $0xc] sm:$0xf] %vm608, %v566
        %613 = vst.msk [vmem:[%s607 + $0x10] sm:$0xf] %vm608, %v568
        %614 = vst.msk [vmem:[%s607 + $0x14] sm:$0xf] %vm608, %v570
        %615 = vst.msk [vmem:[%s607 + $0x18] sm:$0xf] %vm608, %v572
        %616 = vst.msk [vmem:[%s607 + $0x1c] sm:$0xf] %vm608, %v574
        %617 = vst.msk [vmem:[%s607 + $0x20] sm:$0xf] %vm608, %v576
        %618 = vst.msk [vmem:[%s607 + $0x24] sm:$0xf] %vm608, %v578
        %619 = vst.msk [vmem:[%s607 + $0x28] sm:$0xf] %vm608, %v580
        %620 = vst.msk [vmem:[%s607 + $0x2c] sm:$0xf] %vm608, %v582
        %621 = vst.msk [vmem:[%s607 + $0x30] sm:$0xf] %vm608, %v584
        %622 = vst.msk [vmem:[%s607 + $0x34] sm:$0xf] %vm608, %v586
        %623 = vst.msk [vmem:[%s607 + $0x38] sm:$0xf] %vm608, %v588
        %624 = vst.msk [vmem:[%s607 + $0x3c] sm:$0xf] %vm608, %v590
        %vm625 = vsmask.f32 4368
        %vm626 = vmor %vm462, %vm625
        %v628 = vshrl.u32 %v527, 16
        %v630 = vrot.slane %v628, 7
        %v631 = vshll.u32 %v527, 16
        %v633 = vor.u32 %v630, %v631
        %v634 = vrot.slane %v630, 4
        %v636 = vshrl.u32 %v528, 16
        %v638 = vrot.slane %v636, 7
        %v639 = vshll.u32 %v528, 16
        %v641 = vor.u32 %v638, %v639
        %v642 = vsel %vm626, %v634, %v641
        %v644 = vshrl.u32 %v529, 16
        %v646 = vrot.slane %v644, 7
        %v647 = vshll.u32 %v529, 16
        %v649 = vor.u32 %v646, %v647
        %v650 = vrot.slane %v646, 4
        %v652 = vshrl.u32 %v530, 16
        %v654 = vrot.slane %v652, 7
        %v655 = vshll.u32 %v530, 16
        %v657 = vor.u32 %v654, %v655
        %v658 = vsel %vm626, %v650, %v657
        %v660 = vshrl.u32 %v531, 16
        %v662 = vrot.slane %v660, 7
        %v663 = vshll.u32 %v531, 16
        %v665 = vor.u32 %v662, %v663
        %v666 = vrot.slane %v662, 4
        %v668 = vshrl.u32 %v532, 16
        %v670 = vrot.slane %v668, 7
        %v671 = vshll.u32 %v532, 16
        %v673 = vor.u32 %v670, %v671
        %v674 = vsel %vm626, %v666, %v673
        %v676 = vshrl.u32 %v533, 16
        %v678 = vrot.slane %v676, 7
        %v679 = vshll.u32 %v533, 16
        %v681 = vor.u32 %v678, %v679
        %v682 = vrot.slane %v678, 4
        %v684 = vshrl.u32 %v534, 16
        %v686 = vrot.slane %v684, 7
        %v687 = vshll.u32 %v534, 16
        %v689 = vor.u32 %v686, %v687
        %v690 = vsel %vm626, %v682, %v689
        %v692 = vshrl.u32 %v535, 16
        %v694 = vrot.slane %v692, 7
        %v695 = vshll.u32 %v535, 16
        %v697 = vor.u32 %v694, %v695
        %v698 = vrot.slane %v694, 4
        %v700 = vshrl.u32 %v536, 16
        %v702 = vrot.slane %v700, 7
        %v703 = vshll.u32 %v536, 16
        %v705 = vor.u32 %v702, %v703
        %v706 = vsel %vm626, %v698, %v705
        %v708 = vshrl.u32 %v537, 16
        %v710 = vrot.slane %v708, 7
        %v711 = vshll.u32 %v537, 16
        %v713 = vor.u32 %v710, %v711
        %v714 = vrot.slane %v710, 4
        %v716 = vshrl.u32 %v538, 16
        %v718 = vrot.slane %v716, 7
        %v719 = vshll.u32 %v538, 16
        %v721 = vor.u32 %v718, %v719
        %v722 = vsel %vm626, %v714, %v721
        %v724 = vshrl.u32 %v539, 16
        %v726 = vrot.slane %v724, 7
        %v727 = vshll.u32 %v539, 16
        %v729 = vor.u32 %v726, %v727
        %v730 = vrot.slane %v726, 4
        %v732 = vshrl.u32 %v540, 16
        %v734 = vrot.slane %v732, 7
        %v735 = vshll.u32 %v540, 16
        %v737 = vor.u32 %v734, %v735
        %v738 = vsel %vm626, %v730, %v737
        %v740 = vshrl.u32 %v541, 16
        %v742 = vrot.slane %v740, 7
        %v743 = vshll.u32 %v541, 16
        %v745 = vor.u32 %v742, %v743
        %v746 = vrot.slane %v742, 4
        %v748 = vshrl.u32 %v542, 16
        %v750 = vrot.slane %v748, 7
        %v751 = vshll.u32 %v542, 16
        %v753 = vor.u32 %v750, %v751
        %v754 = vsel %vm626, %v746, %v753
        %vm771 = vcmask 60416
        %vm772 = vsmask.f32 7938
        %vm773 = vmand %vm771, %vm772
        %v774 = vld [vmem:[%s607] sm:$0xf]
        %v775 = vsel %vm773, %v633, %v774
        %776 = vst [vmem:[%s607] sm:$0xf] %v775
        %vm777 = vcmask 60416
        %778 = vst.msk [vmem:[%s607 + $0x4] sm:$0xf] %vm777, %v642
        %v779 = vld [vmem:[%s607 + $0x8] sm:$0xf]
        %v780 = vsel %vm773, %v649, %v779
        %781 = vst [vmem:[%s607 + $0x8] sm:$0xf] %v780
        %782 = vst.msk [vmem:[%s607 + $0xc] sm:$0xf] %vm777, %v658
        %v783 = vld [vmem:[%s607 + $0x10] sm:$0xf]
        %v784 = vsel %vm773, %v665, %v783
        %785 = vst [vmem:[%s607 + $0x10] sm:$0xf] %v784
        %786 = vst.msk [vmem:[%s607 + $0x14] sm:$0xf] %vm777, %v674
        %v787 = vld [vmem:[%s607 + $0x18] sm:$0xf]
        %v788 = vsel %vm773, %v681, %v787
        %789 = vst [vmem:[%s607 + $0x18] sm:$0xf] %v788
        %790 = vst.msk [vmem:[%s607 + $0x1c] sm:$0xf] %vm777, %v690
        %v791 = vld [vmem:[%s607 + $0x20] sm:$0xf]
        %v792 = vsel %vm773, %v697, %v791
        %793 = vst [vmem:[%s607 + $0x20] sm:$0xf] %v792
        %794 = vst.msk [vmem:[%s607 + $0x24] sm:$0xf] %vm777, %v706
        %v795 = vld [vmem:[%s607 + $0x28] sm:$0xf]
        %v796 = vsel %vm773, %v713, %v795
        %797 = vst [vmem:[%s607 + $0x28] sm:$0xf] %v796
        %798 = vst.msk [vmem:[%s607 + $0x2c] sm:$0xf] %vm777, %v722
        %v799 = vld [vmem:[%s607 + $0x30] sm:$0xf]
        %v800 = vsel %vm773, %v729, %v799
        %801 = vst [vmem:[%s607 + $0x30] sm:$0xf] %v800
        %802 = vst.msk [vmem:[%s607 + $0x34] sm:$0xf] %vm777, %v738
        %v803 = vld [vmem:[%s607 + $0x38] sm:$0xf]
        %v804 = vsel %vm773, %v745, %v803
        %805 = vst [vmem:[%s607 + $0x38] sm:$0xf] %v804
        %806 = vst.msk [vmem:[%s607 + $0x3c] sm:$0xf] %vm777, %v754
        %vm807 = vsmask.f32 3328
        %vm808 = vsmask.f32 7440
        %vm809 = vmor %vm807, %vm808
        %v810 = vrot.slane %v628, 4
        %v811 = vrot.slane %v631, 5
        %v812 = vor.u32 %v810, %v811
        %v813 = vrot.slane %v812, 4
        %v814 = vrot.slane %v639, 5
        %v815 = vsel %vm809, %v813, %v814
        %v816 = vrot.slane %v636, 4
        %v817 = vor.u32 %v816, %v814
        %v818 = vrot.slane %v817, 4
        %v819 = vrot.slane %v644, 4
        %v820 = vrot.slane %v647, 5
        %v821 = vor.u32 %v819, %v820
        %v822 = vrot.slane %v821, 4
        %v823 = vrot.slane %v655, 5
        %v824 = vsel %vm809, %v822, %v823
        %v825 = vrot.slane %v652, 4
        %v826 = vor.u32 %v825, %v823
        %v827 = vrot.slane %v826, 4
        %v828 = vrot.slane %v660, 4
        %v829 = vrot.slane %v663, 5
        %v830 = vor.u32 %v828, %v829
        %v831 = vrot.slane %v830, 4
        %v832 = vrot.slane %v671, 5
        %v833 = vsel %vm809, %v831, %v832
        %v834 = vrot.slane %v668, 4
        %v835 = vor.u32 %v834, %v832
        %v836 = vrot.slane %v835, 4
        %v837 = vrot.slane %v676, 4
        %v838 = vrot.slane %v679, 5
        %v839 = vor.u32 %v837, %v838
        %v840 = vrot.slane %v839, 4
        %v841 = vrot.slane %v687, 5
        %v842 = vsel %vm809, %v840, %v841
        %v843 = vrot.slane %v684, 4
        %v844 = vor.u32 %v843, %v841
        %v845 = vrot.slane %v844, 4
        %v846 = vrot.slane %v692, 4
        %v847 = vrot.slane %v695, 5
        %v848 = vor.u32 %v846, %v847
        %v849 = vrot.slane %v848, 4
        %v850 = vrot.slane %v703, 5
        %v851 = vsel %vm809, %v849, %v850
        %v852 = vrot.slane %v700, 4
        %v853 = vor.u32 %v852, %v850
        %v854 = vrot.slane %v853, 4
        %v855 = vrot.slane %v708, 4
        %v856 = vrot.slane %v711, 5
        %v857 = vor.u32 %v855, %v856
        %v858 = vrot.slane %v857, 4
        %v859 = vrot.slane %v719, 5
        %v860 = vsel %vm809, %v858, %v859
        %v861 = vrot.slane %v716, 4
        %v862 = vor.u32 %v861, %v859
        %v863 = vrot.slane %v862, 4
        %v864 = vrot.slane %v724, 4
        %v865 = vrot.slane %v727, 5
        %v866 = vor.u32 %v864, %v865
        %v867 = vrot.slane %v866, 4
        %v868 = vrot.slane %v735, 5
        %v869 = vsel %vm809, %v867, %v868
        %v870 = vrot.slane %v732, 4
        %v871 = vor.u32 %v870, %v868
        %v872 = vrot.slane %v871, 4
        %v873 = vrot.slane %v740, 4
        %v874 = vrot.slane %v743, 5
        %v875 = vor.u32 %v873, %v874
        %v876 = vrot.slane %v875, 4
        %v877 = vrot.slane %v751, 5
        %v878 = vsel %vm809, %v876, %v877
        %v879 = vrot.slane %v748, 4
        %v880 = vor.u32 %v879, %v877
        %v881 = vrot.slane %v880, 4
        %882 = vrot.lane.b32.xlu0 %v815, 16
        %v883 = vpop.permute.xlu0 %882
        %884 = vrot.lane.b32.xlu0 %v818, 16
        %v885 = vpop.permute.xlu0 %884
        %886 = vrot.lane.b32.xlu0 %v824, 16
        %v887 = vpop.permute.xlu0 %886
        %888 = vrot.lane.b32.xlu0 %v827, 16
        %v889 = vpop.permute.xlu0 %888
        %890 = vrot.lane.b32.xlu0 %v833, 16
        %v891 = vpop.permute.xlu0 %890
        %892 = vrot.lane.b32.xlu0 %v836, 16
        %v893 = vpop.permute.xlu0 %892
        %894 = vrot.lane.b32.xlu0 %v842, 16
        %v895 = vpop.permute.xlu0 %894
        %896 = vrot.lane.b32.xlu0 %v845, 16
        %v897 = vpop.permute.xlu0 %896
        %898 = vrot.lane.b32.xlu0 %v851, 16
        %v899 = vpop.permute.xlu0 %898
        %900 = vrot.lane.b32.xlu0 %v854, 16
        %v901 = vpop.permute.xlu0 %900
        %902 = vrot.lane.b32.xlu0 %v860, 16
        %v903 = vpop.permute.xlu0 %902
        %904 = vrot.lane.b32.xlu0 %v863, 16
        %v905 = vpop.permute.xlu0 %904
        %906 = vrot.lane.b32.xlu0 %v869, 16
        %v907 = vpop.permute.xlu0 %906
        %908 = vrot.lane.b32.xlu0 %v872, 16
        %v909 = vpop.permute.xlu0 %908
        %910 = vrot.lane.b32.xlu0 %v878, 16
        %v911 = vpop.permute.xlu0 %910
        %912 = vrot.lane.b32.xlu0 %v881, 16
        %v913 = vpop.permute.xlu0 %912
        %vm930 = vcmask 191616
        %931 = vst.msk [vmem:[%s607] sm:$0xf] %vm930, %v883
        %vm932 = vcmask 191616
        %vm933 = vmand %vm932, %vm807
        %v934 = vld [vmem:[%s607 + $0x4] sm:$0xf]
        %v935 = vsel %vm933, %v885, %v934
        %936 = vst [vmem:[%s607 + $0x4] sm:$0xf] %v935
        %937 = vst.msk [vmem:[%s607 + $0x8] sm:$0xf] %vm930, %v887
        %v938 = vld [vmem:[%s607 + $0xc] sm:$0xf]
        %v939 = vsel %vm933, %v889, %v938
        %940 = vst [vmem:[%s607 + $0xc] sm:$0xf] %v939
        %941 = vst.msk [vmem:[%s607 + $0x10] sm:$0xf] %vm930, %v891
        %v942 = vld [vmem:[%s607 + $0x14] sm:$0xf]
        %v943 = vsel %vm933, %v893, %v942
        %944 = vst [vmem:[%s607 + $0x14] sm:$0xf] %v943
        %945 = vst.msk [vmem:[%s607 + $0x18] sm:$0xf] %vm930, %v895
        %v946 = vld [vmem:[%s607 + $0x1c] sm:$0xf]
        %v947 = vsel %vm933, %v897, %v946
        %948 = vst [vmem:[%s607 + $0x1c] sm:$0xf] %v947
        %949 = vst.msk [vmem:[%s607 + $0x20] sm:$0xf] %vm930, %v899
        %v950 = vld [vmem:[%s607 + $0x24] sm:$0xf]
        %v951 = vsel %vm933, %v901, %v950
        %952 = vst [vmem:[%s607 + $0x24] sm:$0xf] %v951
        %953 = vst.msk [vmem:[%s607 + $0x28] sm:$0xf] %vm930, %v903
        %v954 = vld [vmem:[%s607 + $0x2c] sm:$0xf]
        %v955 = vsel %vm933, %v905, %v954
        %956 = vst [vmem:[%s607 + $0x2c] sm:$0xf] %v955
        %957 = vst.msk [vmem:[%s607 + $0x30] sm:$0xf] %vm930, %v907
        %v958 = vld [vmem:[%s607 + $0x34] sm:$0xf]
        %v959 = vsel %vm933, %v909, %v958
        %960 = vst [vmem:[%s607 + $0x34] sm:$0xf] %v959
        %961 = vst.msk [vmem:[%s607 + $0x38] sm:$0xf] %vm930, %v911
        %v962 = vld [vmem:[%s607 + $0x3c] sm:$0xf]
        %v963 = vsel %vm933, %v913, %v962
        %964 = vst [vmem:[%s607 + $0x3c] sm:$0xf] %v963
        %p965 = scmp.eq.s32.totalorder %s27, 0
        // Predicated region
        $region45: #{tpu_custom_call.1} parent=43 // pred_check
          %p966 = pneg %p965
        $region46: #{tpu_custom_call.1} parent=43 // pred_check_branch
          %968 = sbr.rel (%p966) target = $region48
        $region47: #{tpu_custom_call.1} parent=43 // pred_region
          %vm969 = vcmask 191488
          %970 = vst.msk [vmem:[#allocation2] sm:$0xf] %vm969, 0
          %971 = vst.msk [vmem:[#allocation2 + $0x4] sm:$0xf] %vm969, 0
        $region48: #{tpu_custom_call.1} parent=43 // pred_fallthru
          _
        %p972 = scmp.gt.s32.totalorder %s27, 0
        // Predicated region
        $region49: #{tpu_custom_call.1} parent=43 // pred_check
          %p973 = pneg %p972
        $region50: #{tpu_custom_call.1} parent=43 // pred_check_branch
          %975 = sbr.rel (%p973) target = $region52
        $region51: #{tpu_custom_call.1} parent=43 // pred_region
          %v976 = vld [vmem:[%s427] sm:$0xf]
          %v977 = vld [vmem:[%s427 + $0x4] sm:$0xf]
          %980 = vrot.lane.b32.xlu0 %v976, 8
          %v981 = vpop.permute.xlu0 %980
          %982 = vrot.lane.b32.xlu0 %v977, 8
          %v983 = vpop.permute.xlu0 %982
          %986 = vst.msk [vmem:[#allocation2] sm:$0xf] %vm608, %v981
          %987 = vst.msk [vmem:[#allocation2 + $0x4] sm:$0xf] %vm608, %v983
          %v989 = vshrl.u32 %v976, 16
          %v991 = vrot.slane %v989, 7
          %v992 = vshll.u32 %v976, 16
          %v994 = vor.u32 %v991, %v992
          %v995 = vrot.slane %v991, 4
          %v997 = vshrl.u32 %v977, 16
          %v999 = vrot.slane %v997, 7
          %v1000 = vshll.u32 %v977, 16
          %v1002 = vor.u32 %v999, %v1000
          %v1003 = vsel %vm626, %v995, %v1002
          %v1006 = vld [vmem:[#allocation2] sm:$0xf]
          %v1007 = vsel %vm773, %v994, %v1006
          %1008 = vst [vmem:[#allocation2] sm:$0xf] %v1007
          %1009 = vst.msk [vmem:[#allocation2 + $0x4] sm:$0xf] %vm777, %v1003
          %v1010 = vrot.slane %v989, 4
          %v1011 = vrot.slane %v992, 5
          %v1012 = vor.u32 %v1010, %v1011
          %v1013 = vrot.slane %v1012, 4
          %v1014 = vrot.slane %v1000, 5
          %v1015 = vsel %vm809, %v1013, %v1014
          %v1016 = vrot.slane %v997, 4
          %v1017 = vor.u32 %v1016, %v1014
          %v1018 = vrot.slane %v1017, 4
          %1019 = vrot.lane.b32.xlu0 %v1015, 16
          %v1020 = vpop.permute.xlu0 %1019
          %1021 = vrot.lane.b32.xlu0 %v1018, 16
          %v1022 = vpop.permute.xlu0 %1021
          %1025 = vst.msk [vmem:[#allocation2] sm:$0xf] %vm930, %v1020
          %v1026 = vld [vmem:[#allocation2 + $0x4] sm:$0xf]
          %v1027 = vsel %vm933, %v1022, %v1026
          %1028 = vst [vmem:[#allocation2 + $0x4] sm:$0xf] %v1027
        $region52: #{tpu_custom_call.1} parent=43 // pred_fallthru
          _
        %p1029 = scmp.eq.s32.totalorder %s27, 1
        // Predicated region
        $region53: #{tpu_custom_call.1} parent=43 // pred_check
          %p1030 = pneg %p1029
        $region54: #{tpu_custom_call.1} parent=43 // pred_check_branch
          %1032 = sbr.rel (%p1030) target = $region56
        $region55: #{tpu_custom_call.1} parent=43 // pred_region
          %s1033 = scalar_lea.vmem [#allocation2], 72
          %vm1034 = vcmask 191488
          %1035 = vst.msk [vmem:[%s1033] sm:$0xf] %vm1034, 0
          %1036 = vst.msk [vmem:[%s1033 + $0x4] sm:$0xf] %vm1034, 0
        $region56: #{tpu_custom_call.1} parent=43 // pred_fallthru
          _
        %p1037 = scmp.lt.s32.totalorder %s27, 1
        // Predicated region
        $region57: #{tpu_custom_call.1} parent=43 // pred_check
          %p1038 = pneg %p1037
        $region58: #{tpu_custom_call.1} parent=43 // pred_check_branch
          %1040 = sbr.rel (%p1038) target = $region60
        $region59: #{tpu_custom_call.1} parent=43 // pred_region
          %v1041 = vld [vmem:[%s444] sm:$0xf]
          %v1042 = vld [vmem:[%s444 + $0x4] sm:$0xf]
          %1045 = vrot.lane.b32.xlu0 %v1041, 8
          %v1046 = vpop.permute.xlu0 %1045
          %1047 = vrot.lane.b32.xlu0 %v1042, 8
          %v1048 = vpop.permute.xlu0 %1047
          %s1051 = scalar_lea.vmem [#allocation2], 72
          %1052 = vst.msk [vmem:[%s1051] sm:$0xf] %vm608, %v1046
          %1053 = vst.msk [vmem:[%s1051 + $0x4] sm:$0xf] %vm608, %v1048
          %v1055 = vshrl.u32 %v1041, 16
          %v1057 = vrot.slane %v1055, 7
          %v1058 = vshll.u32 %v1041, 16
          %v1060 = vor.u32 %v1057, %v1058
          %v1061 = vrot.slane %v1057, 4
          %v1063 = vshrl.u32 %v1042, 16
          %v1065 = vrot.slane %v1063, 7
          %v1066 = vshll.u32 %v1042, 16
          %v1068 = vor.u32 %v1065, %v1066
          %v1069 = vsel %vm626, %v1061, %v1068
          %v1072 = vld [vmem:[%s1051] sm:$0xf]
          %v1073 = vsel %vm773, %v1060, %v1072
          %1074 = vst [vmem:[%s1051] sm:$0xf] %v1073
          %1075 = vst.msk [vmem:[%s1051 + $0x4] sm:$0xf] %vm777, %v1069
          %v1076 = vrot.slane %v1055, 4
          %v1077 = vrot.slane %v1058, 5
          %v1078 = vor.u32 %v1076, %v1077
          %v1079 = vrot.slane %v1078, 4
          %v1080 = vrot.slane %v1066, 5
          %v1081 = vsel %vm809, %v1079, %v1080
          %v1082 = vrot.slane %v1063, 4
          %v1083 = vor.u32 %v1082, %v1080
          %v1084 = vrot.slane %v1083, 4
          %1085 = vrot.lane.b32.xlu0 %v1081, 16
          %v1086 = vpop.permute.xlu0 %1085
          %1087 = vrot.lane.b32.xlu0 %v1084, 16
          %v1088 = vpop.permute.xlu0 %1087
          %1091 = vst.msk [vmem:[%s1051] sm:$0xf] %vm930, %v1086
          %v1092 = vld [vmem:[%s1051 + $0x4] sm:$0xf]
          %v1093 = vsel %vm933, %v1088, %v1092
          %1094 = vst [vmem:[%s1051 + $0x4] sm:$0xf] %v1093
        $region60: #{tpu_custom_call.1} parent=43 // pred_fallthru
          _
        %v1095 = vld [vmem:[%s5] sm:$0xf]
        %v1096 = vld [vmem:[%s5 + $0x4] sm:$0xf]
        %v1097 = vld [vmem:[%s5 + $0x8] sm:$0xf]
        %v1098 = vld [vmem:[%s5 + $0xc] sm:$0xf]
        %v1099 = vld [vmem:[%s5 + $0x10] sm:$0xf]
        %v1100 = vld [vmem:[%s5 + $0x14] sm:$0xf]
        %v1101 = vld [vmem:[%s5 + $0x18] sm:$0xf]
        %v1102 = vld [vmem:[%s5 + $0x1c] sm:$0xf]
        %v1103 = vld [vmem:[%s5 + $0x20] sm:$0xf]
        %v1104 = vld [vmem:[#allocation2] sm:$0xf]
        %v1105 = vld [vmem:[#allocation2 + $0x4] sm:$0xf]
        %v1106 = vld [vmem:[#allocation2 + $0x8] sm:$0xf]
        %v1107 = vld [vmem:[#allocation2 + $0xc] sm:$0xf]
        %v1108 = vld [vmem:[#allocation2 + $0x10] sm:$0xf]
        %v1109 = vld [vmem:[#allocation2 + $0x14] sm:$0xf]
        %v1110 = vld [vmem:[#allocation2 + $0x18] sm:$0xf]
        %v1111 = vld [vmem:[#allocation2 + $0x1c] sm:$0xf]
        %v1112 = vld [vmem:[#allocation2 + $0x20] sm:$0xf]
        %v1113 = vld [vmem:[#allocation2 + $0x24] sm:$0xf]
        %v1114 = vld [vmem:[#allocation2 + $0x28] sm:$0xf]
        %v1115 = vld [vmem:[#allocation2 + $0x2c] sm:$0xf]
        %v1116 = vld [vmem:[#allocation2 + $0x30] sm:$0xf]
        %v1117 = vld [vmem:[#allocation2 + $0x34] sm:$0xf]
        %v1118 = vld [vmem:[#allocation2 + $0x38] sm:$0xf]
        %v1119 = vld [vmem:[#allocation2 + $0x3c] sm:$0xf]
        %v1120 = vld [vmem:[%s607] sm:$0xf]
        %v1121 = vld [vmem:[%s607 + $0x4] sm:$0xf]
        %v1122 = vld [vmem:[%s607 + $0x8] sm:$0xf]
        %v1123 = vld [vmem:[%s607 + $0xc] sm:$0xf]
        %v1124 = vld [vmem:[%s607 + $0x10] sm:$0xf]
        %v1125 = vld [vmem:[%s607 + $0x14] sm:$0xf]
        %v1126 = vld [vmem:[%s607 + $0x18] sm:$0xf]
        %v1127 = vld [vmem:[%s607 + $0x1c] sm:$0xf]
        %v1128 = vld [vmem:[%s607 + $0x20] sm:$0xf]
        %v1129 = vld [vmem:[%s607 + $0x24] sm:$0xf]
        %v1130 = vld [vmem:[%s607 + $0x28] sm:$0xf]
        %v1131 = vld [vmem:[%s607 + $0x2c] sm:$0xf]
        %v1132 = vld [vmem:[%s607 + $0x30] sm:$0xf]
        %v1133 = vld [vmem:[%s607 + $0x34] sm:$0xf]
        %v1134 = vld [vmem:[%s607 + $0x38] sm:$0xf]
        %v1135 = vld [vmem:[%s607 + $0x3c] sm:$0xf]
        %v1152 = vunpack.c.l.b16 %v1120
        %v1153 = vunpack.c.l.b16 %v1121
        %v1154 = vunpack.c.l.b16 %v1122
        %v1155 = vunpack.c.l.b16 %v1123
        %v1156 = vunpack.c.l.b16 %v1124
        %v1157 = vunpack.c.l.b16 %v1125
        %v1158 = vunpack.c.l.b16 %v1126
        %v1159 = vunpack.c.l.b16 %v1127
        %v1160 = vunpack.c.l.b16 %v1128
        %v1161 = vunpack.c.l.b16 %v1129
        %v1162 = vunpack.c.l.b16 %v1130
        %v1163 = vunpack.c.l.b16 %v1131
        %v1164 = vunpack.c.l.b16 %v1132
        %v1165 = vunpack.c.l.b16 %v1133
        %v1166 = vunpack.c.l.b16 %v1134
        %v1167 = vunpack.c.l.b16 %v1135
        %v1168 = vpack.c.b16 %v1153, %v1152
        %v1169 = vpack.c.b16 %v1155, %v1154
        %v1170 = vpack.c.b16 %v1157, %v1156
        %v1171 = vpack.c.b16 %v1159, %v1158
        %v1172 = vpack.c.b16 %v1161, %v1160
        %v1173 = vpack.c.b16 %v1163, %v1162
        %v1174 = vpack.c.b16 %v1165, %v1164
        %v1175 = vpack.c.b16 %v1167, %v1166
        %v1179 = vunpack.c.l.b16 %v1098
        %v1180 = vunpack.c.l.b16 %v1099
        %v1181 = vunpack.c.l.b16 %v1100
        %v1182 = vpack.c.b16 %v1180, %v1179
        %v1183 = vpack.c.b16 %v1181, %v1181
        %vm1185 = vcmask 195584
        %v1187 = vsel %vm1185, %v1168, 0
        %v1190 = vsel %vm1185, %v1169, 0
        %v1193 = vsel %vm1185, %v1170, 0
        %v1196 = vsel %vm1185, %v1171, 0
        %v1199 = vsel %vm1185, %v1172, 0
        %v1202 = vsel %vm1185, %v1173, 0
        %v1205 = vsel %vm1185, %v1174, 0
        %v1208 = vsel %vm1185, %v1175, 0
        %vm1210 = vcmask 1043456
        %v1212 = vsel %vm1210, %v1183, 0
        %1214 = vmatpush.bf16.msra.mxu0 0
        %1215 = vmatpush.bf16.msra.mxu0 0
        %1216 = vmatpush.bf16.msra.mxu0 0
        %1217 = vmatpush.bf16.msra.mxu0 0
        %1218 = vmatpush.bf16.msra.mxu0 0
        %1219 = vmatpush.bf16.msra.mxu0 0
        %1220 = vmatpush.bf16.msra.mxu0 %v1212
        %1221 = vmatpush.bf16.msra.mxu0 %v1182
        %1222 = vmatmul.bf16.gmra.mxu0 %v1187
        %v1223 = vpop.f32.mrf.mxu0
        %v1224 = vadd.f32 0.0, %v1223
        %v1225 = vpop.f32.mrf.mxu0
        %v1226 = vadd.f32 0.0, %v1225
        %1227 = vmatmul.bf16.gmra.mxu0 %v1190
        %v1228 = vpop.f32.mrf.mxu0
        %v1229 = vadd.f32 0.0, %v1228
        %v1230 = vpop.f32.mrf.mxu0
        %v1231 = vadd.f32 0.0, %v1230
        %1232 = vmatmul.bf16.gmra.mxu0 %v1193
        %v1233 = vpop.f32.mrf.mxu0
        %v1234 = vadd.f32 0.0, %v1233
        %v1235 = vpop.f32.mrf.mxu0
        %v1236 = vadd.f32 0.0, %v1235
        %1237 = vmatmul.bf16.gmra.mxu0 %v1196
        %v1238 = vpop.f32.mrf.mxu0
        %v1239 = vadd.f32 0.0, %v1238
        %v1240 = vpop.f32.mrf.mxu0
        %v1241 = vadd.f32 0.0, %v1240
        %1242 = vmatmul.bf16.gmra.mxu0 %v1199
        %v1243 = vpop.f32.mrf.mxu0
        %v1244 = vadd.f32 0.0, %v1243
        %v1245 = vpop.f32.mrf.mxu0
        %v1246 = vadd.f32 0.0, %v1245
        %1247 = vmatmul.bf16.gmra.mxu0 %v1202
        %v1248 = vpop.f32.mrf.mxu0
        %v1249 = vadd.f32 0.0, %v1248
        %v1250 = vpop.f32.mrf.mxu0
        %v1251 = vadd.f32 0.0, %v1250
        %1252 = vmatmul.bf16.gmra.mxu0 %v1205
        %v1253 = vpop.f32.mrf.mxu0
        %v1254 = vadd.f32 0.0, %v1253
        %v1255 = vpop.f32.mrf.mxu0
        %v1256 = vadd.f32 0.0, %v1255
        %1257 = vmatmul.bf16.gmra.mxu0 %v1208
        %v1258 = vpop.f32.mrf.mxu0
        %v1259 = vadd.f32 0.0, %v1258
        %v1260 = vpop.f32.mrf.mxu0
        %v1261 = vadd.f32 0.0, %v1260
        %1262 = vdwg.mxu0
        %v1279 = vunpack.c.l.b16 %v1104
        %v1280 = vunpack.c.l.b16 %v1105
        %v1281 = vunpack.c.l.b16 %v1106
        %v1282 = vunpack.c.l.b16 %v1107
        %v1283 = vunpack.c.l.b16 %v1108
        %v1284 = vunpack.c.l.b16 %v1109
        %v1285 = vunpack.c.l.b16 %v1110
        %v1286 = vunpack.c.l.b16 %v1111
        %v1287 = vunpack.c.l.b16 %v1112
        %v1288 = vunpack.c.l.b16 %v1113
        %v1289 = vunpack.c.l.b16 %v1114
        %v1290 = vunpack.c.l.b16 %v1115
        %v1291 = vunpack.c.l.b16 %v1116
        %v1292 = vunpack.c.l.b16 %v1117
        %v1293 = vunpack.c.l.b16 %v1118
        %v1294 = vunpack.c.l.b16 %v1119
        %v1295 = vpack.c.b16 %v1280, %v1279
        %v1296 = vpack.c.b16 %v1282, %v1281
        %v1297 = vpack.c.b16 %v1284, %v1283
        %v1298 = vpack.c.b16 %v1286, %v1285
        %v1299 = vpack.c.b16 %v1288, %v1287
        %v1300 = vpack.c.b16 %v1290, %v1289
        %v1301 = vpack.c.b16 %v1292, %v1291
        %v1302 = vpack.c.b16 %v1294, %v1293
        %v1306 = vunpack.c.l.b16 %v1095
        %v1307 = vunpack.c.l.b16 %v1096
        %v1308 = vunpack.c.l.b16 %v1097
        %v1309 = vpack.c.b16 %v1307, %v1306
        %v1310 = vpack.c.b16 %v1308, %v1308
        %v1313 = vsel %vm1185, %v1295, 0
        %v1316 = vsel %vm1185, %v1296, 0
        %v1319 = vsel %vm1185, %v1297, 0
        %v1322 = vsel %vm1185, %v1298, 0
        %v1325 = vsel %vm1185, %v1299, 0
        %v1328 = vsel %vm1185, %v1300, 0
        %v1331 = vsel %vm1185, %v1301, 0
        %v1334 = vsel %vm1185, %v1302, 0
        %v1337 = vsel %vm1210, %v1310, 0
        %1339 = vmatpush.bf16.msra.mxu0 0
        %1340 = vmatpush.bf16.msra.mxu0 0
        %1341 = vmatpush.bf16.msra.mxu0 0
        %1342 = vmatpush.bf16.msra.mxu0 0
        %1343 = vmatpush.bf16.msra.mxu0 0
        %1344 = vmatpush.bf16.msra.mxu0 0
        %1345 = vmatpush.bf16.msra.mxu0 %v1337
        %1346 = vmatpush.bf16.msra.mxu0 %v1309
        %1347 = vmatmul.bf16.gmra.mxu0 %v1313
        %v1348 = vpop.f32.mrf.mxu0
        %v1349 = vadd.f32 %v1224, %v1348
        %v1350 = vpop.f32.mrf.mxu0
        %v1351 = vadd.f32 %v1226, %v1350
        %1352 = vmatmul.bf16.gmra.mxu0 %v1316
        %v1353 = vpop.f32.mrf.mxu0
        %v1354 = vadd.f32 %v1229, %v1353
        %v1355 = vpop.f32.mrf.mxu0
        %v1356 = vadd.f32 %v1231, %v1355
        %1357 = vmatmul.bf16.gmra.mxu0 %v1319
        %v1358 = vpop.f32.mrf.mxu0
        %v1359 = vadd.f32 %v1234, %v1358
        %v1360 = vpop.f32.mrf.mxu0
        %v1361 = vadd.f32 %v1236, %v1360
        %1362 = vmatmul.bf16.gmra.mxu0 %v1322
        %v1363 = vpop.f32.mrf.mxu0
        %v1364 = vadd.f32 %v1239, %v1363
        %v1365 = vpop.f32.mrf.mxu0
        %v1366 = vadd.f32 %v1241, %v1365
        %1367 = vmatmul.bf16.gmra.mxu0 %v1325
        %v1368 = vpop.f32.mrf.mxu0
        %v1369 = vadd.f32 %v1244, %v1368
        %v1370 = vpop.f32.mrf.mxu0
        %v1371 = vadd.f32 %v1246, %v1370
        %1372 = vmatmul.bf16.gmra.mxu0 %v1328
        %v1373 = vpop.f32.mrf.mxu0
        %v1374 = vadd.f32 %v1249, %v1373
        %v1375 = vpop.f32.mrf.mxu0
        %v1376 = vadd.f32 %v1251, %v1375
        %1377 = vmatmul.bf16.gmra.mxu0 %v1331
        %v1378 = vpop.f32.mrf.mxu0
        %v1379 = vadd.f32 %v1254, %v1378
        %v1380 = vpop.f32.mrf.mxu0
        %v1381 = vadd.f32 %v1256, %v1380
        %1382 = vmatmul.bf16.gmra.mxu0 %v1334
        %v1383 = vpop.f32.mrf.mxu0
        %v1384 = vadd.f32 %v1259, %v1383
        %v1385 = vpop.f32.mrf.mxu0
        %v1386 = vadd.f32 %v1261, %v1385
        %1387 = vdwg.mxu0
        %s1388 = scalar_lea.vmem [#allocation2], 16
        %v1389 = vld [vmem:[%s1388] sm:$0xf]
        %v1390 = vld [vmem:[%s1388 + $0x4] sm:$0xf]
        %v1391 = vld [vmem:[%s1388 + $0x8] sm:$0xf]
        %v1392 = vld [vmem:[%s1388 + $0xc] sm:$0xf]
        %v1393 = vld [vmem:[%s1388 + $0x10] sm:$0xf]
        %v1394 = vld [vmem:[%s1388 + $0x14] sm:$0xf]
        %v1395 = vld [vmem:[%s1388 + $0x18] sm:$0xf]
        %v1396 = vld [vmem:[%s1388 + $0x1c] sm:$0xf]
        %v1397 = vld [vmem:[%s1388 + $0x20] sm:$0xf]
        %v1398 = vld [vmem:[%s1388 + $0x24] sm:$0xf]
        %v1399 = vld [vmem:[%s1388 + $0x28] sm:$0xf]
        %v1400 = vld [vmem:[%s1388 + $0x2c] sm:$0xf]
        %v1401 = vld [vmem:[%s1388 + $0x30] sm:$0xf]
        %v1402 = vld [vmem:[%s1388 + $0x34] sm:$0xf]
        %v1403 = vld [vmem:[%s1388 + $0x38] sm:$0xf]
        %v1404 = vld [vmem:[%s1388 + $0x3c] sm:$0xf]
        %v1421 = vunpack.c.l.b16 %v1389
        %v1422 = vunpack.c.l.b16 %v1390
        %v1423 = vunpack.c.l.b16 %v1391
        %v1424 = vunpack.c.l.b16 %v1392
        %v1425 = vunpack.c.l.b16 %v1393
        %v1426 = vunpack.c.l.b16 %v1394
        %v1427 = vunpack.c.l.b16 %v1395
        %v1428 = vunpack.c.l.b16 %v1396
        %v1429 = vunpack.c.l.b16 %v1397
        %v1430 = vunpack.c.l.b16 %v1398
        %v1431 = vunpack.c.l.b16 %v1399
        %v1432 = vunpack.c.l.b16 %v1400
        %v1433 = vunpack.c.l.b16 %v1401
        %v1434 = vunpack.c.l.b16 %v1402
        %v1435 = vunpack.c.l.b16 %v1403
        %v1436 = vunpack.c.l.b16 %v1404
        %v1437 = vpack.c.b16 %v1422, %v1421
        %v1438 = vpack.c.b16 %v1424, %v1423
        %v1439 = vpack.c.b16 %v1426, %v1425
        %v1440 = vpack.c.b16 %v1428, %v1427
        %v1441 = vpack.c.b16 %v1430, %v1429
        %v1442 = vpack.c.b16 %v1432, %v1431
        %v1443 = vpack.c.b16 %v1434, %v1433
        %v1444 = vpack.c.b16 %v1436, %v1435
        %v1448 = vunpack.c.l.b16 %v1101
        %v1449 = vunpack.c.l.b16 %v1102
        %v1450 = vunpack.c.l.b16 %v1103
        %v1451 = vpack.c.b16 %v1449, %v1448
        %v1452 = vpack.c.b16 %v1450, %v1450
        %v1455 = vsel %vm1185, %v1437, 0
        %v1458 = vsel %vm1185, %v1438, 0
        %v1461 = vsel %vm1185, %v1439, 0
        %v1464 = vsel %vm1185, %v1440, 0
        %v1467 = vsel %vm1185, %v1441, 0
        %v1470 = vsel %vm1185, %v1442, 0
        %v1473 = vsel %vm1185, %v1443, 0
        %v1476 = vsel %vm1185, %v1444, 0
        %v1479 = vsel %vm1210, %v1452, 0
        %1481 = vmatpush.bf16.msra.mxu0 0
        %1482 = vmatpush.bf16.msra.mxu0 0
        %1483 = vmatpush.bf16.msra.mxu0 0
        %1484 = vmatpush.bf16.msra.mxu0 0
        %1485 = vmatpush.bf16.msra.mxu0 0
        %1486 = vmatpush.bf16.msra.mxu0 0
        %1487 = vmatpush.bf16.msra.mxu0 %v1479
        %1488 = vmatpush.bf16.msra.mxu0 %v1451
        %1489 = vmatmul.bf16.gmra.mxu0 %v1455
        %v1490 = vpop.f32.mrf.mxu0
        %v1491 = vadd.f32 0.0, %v1490
        %v1492 = vpop.f32.mrf.mxu0
        %v1493 = vadd.f32 0.0, %v1492
        %1494 = vmatmul.bf16.gmra.mxu0 %v1458
        %v1495 = vpop.f32.mrf.mxu0
        %v1496 = vadd.f32 0.0, %v1495
        %v1497 = vpop.f32.mrf.mxu0
        %v1498 = vadd.f32 0.0, %v1497
        %1499 = vmatmul.bf16.gmra.mxu0 %v1461
        %v1500 = vpop.f32.mrf.mxu0
        %v1501 = vadd.f32 0.0, %v1500
        %v1502 = vpop.f32.mrf.mxu0
        %v1503 = vadd.f32 0.0, %v1502
        %1504 = vmatmul.bf16.gmra.mxu0 %v1464
        %v1505 = vpop.f32.mrf.mxu0
        %v1506 = vadd.f32 0.0, %v1505
        %v1507 = vpop.f32.mrf.mxu0
        %v1508 = vadd.f32 0.0, %v1507
        %1509 = vmatmul.bf16.gmra.mxu0 %v1467
        %v1510 = vpop.f32.mrf.mxu0
        %v1511 = vadd.f32 0.0, %v1510
        %v1512 = vpop.f32.mrf.mxu0
        %v1513 = vadd.f32 0.0, %v1512
        %1514 = vmatmul.bf16.gmra.mxu0 %v1470
        %v1515 = vpop.f32.mrf.mxu0
        %v1516 = vadd.f32 0.0, %v1515
        %v1517 = vpop.f32.mrf.mxu0
        %v1518 = vadd.f32 0.0, %v1517
        %1519 = vmatmul.bf16.gmra.mxu0 %v1473
        %v1520 = vpop.f32.mrf.mxu0
        %v1521 = vadd.f32 0.0, %v1520
        %v1522 = vpop.f32.mrf.mxu0
        %v1523 = vadd.f32 0.0, %v1522
        %1524 = vmatmul.bf16.gmra.mxu0 %v1476
        %v1525 = vpop.f32.mrf.mxu0
        %v1526 = vadd.f32 0.0, %v1525
        %v1527 = vpop.f32.mrf.mxu0
        %v1528 = vadd.f32 0.0, %v1527
        %1529 = vdwg.mxu0
        %v1530 = vadd.f32 %v1349, %v1491
        %v1531 = vadd.f32 %v1351, %v1493
        %v1532 = vadd.f32 %v1354, %v1496
        %v1533 = vadd.f32 %v1356, %v1498
        %v1534 = vadd.f32 %v1359, %v1501
        %v1535 = vadd.f32 %v1361, %v1503
        %v1536 = vadd.f32 %v1364, %v1506
        %v1537 = vadd.f32 %v1366, %v1508
        %v1538 = vadd.f32 %v1369, %v1511
        %v1539 = vadd.f32 %v1371, %v1513
        %v1540 = vadd.f32 %v1374, %v1516
        %v1541 = vadd.f32 %v1376, %v1518
        %v1542 = vadd.f32 %v1379, %v1521
        %v1543 = vadd.f32 %v1381, %v1523
        %v1544 = vadd.f32 %v1384, %v1526
        %v1545 = vadd.f32 %v1386, %v1528
        %v1546 = vpack.c.bf16 %v1530, %v1530
        %v1547 = vpack.c.bf16 %v1531, %v1531
        %v1548 = vpack.c.bf16 %v1532, %v1532
        %v1549 = vpack.c.bf16 %v1533, %v1533
        %v1550 = vpack.c.bf16 %v1534, %v1534
        %v1551 = vpack.c.bf16 %v1535, %v1535
        %v1552 = vpack.c.bf16 %v1536, %v1536
        %v1553 = vpack.c.bf16 %v1537, %v1537
        %v1554 = vpack.c.bf16 %v1538, %v1538
        %v1555 = vpack.c.bf16 %v1539, %v1539
        %v1556 = vpack.c.bf16 %v1540, %v1540
        %v1557 = vpack.c.bf16 %v1541, %v1541
        %v1558 = vpack.c.bf16 %v1542, %v1542
        %v1559 = vpack.c.bf16 %v1543, %v1543
        %v1560 = vpack.c.bf16 %v1544, %v1544
        %v1561 = vpack.c.bf16 %v1545, %v1545
        %1562 = vst.msk [vmem:[%s458] sm:$0xf] %vm777, %v1546
        %1563 = vst.msk [vmem:[%s458 + $0x4] sm:$0xf] %vm777, %v1547
        %1564 = vst.msk [vmem:[%s458 + $0x8] sm:$0xf] %vm777, %v1548
        %1565 = vst.msk [vmem:[%s458 + $0xc] sm:$0xf] %vm777, %v1549
        %1566 = vst.msk [vmem:[%s458 + $0x10] sm:$0xf] %vm777, %v1550
        %1567 = vst.msk [vmem:[%s458 + $0x14] sm:$0xf] %vm777, %v1551
        %1568 = vst.msk [vmem:[%s458 + $0x18] sm:$0xf] %vm777, %v1552
        %1569 = vst.msk [vmem:[%s458 + $0x1c] sm:$0xf] %vm777, %v1553
        %1570 = vst.msk [vmem:[%s458 + $0x20] sm:$0xf] %vm777, %v1554
        %1571 = vst.msk [vmem:[%s458 + $0x24] sm:$0xf] %vm777, %v1555
        %1572 = vst.msk [vmem:[%s458 + $0x28] sm:$0xf] %vm777, %v1556
        %1573 = vst.msk [vmem:[%s458 + $0x2c] sm:$0xf] %vm777, %v1557
        %1574 = vst.msk [vmem:[%s458 + $0x30] sm:$0xf] %vm777, %v1558
        %1575 = vst.msk [vmem:[%s458 + $0x34] sm:$0xf] %vm777, %v1559
        %1576 = vst.msk [vmem:[%s458 + $0x38] sm:$0xf] %vm777, %v1560
        %1577 = vst.msk [vmem:[%s458 + $0x3c] sm:$0xf] %vm777, %v1561
        %vm1578 = vcmask 64512
        %v1579 = vsel %vm1578, %v1530, 0.0
        %v1580 = vsel %vm1578, %v1531, 0.0
        %v1581 = vadd.f32 %v1579, %v1580
        %v1582 = vsel %vm1578, %v1532, 0.0
        %v1583 = vadd.f32 %v1581, %v1582
        %v1584 = vsel %vm1578, %v1533, 0.0
        %v1585 = vadd.f32 %v1583, %v1584
        %v1586 = vsel %vm1578, %v1534, 0.0
        %v1587 = vadd.f32 %v1585, %v1586
        %v1588 = vsel %vm1578, %v1535, 0.0
        %v1589 = vadd.f32 %v1587, %v1588
        %v1590 = vsel %vm1578, %v1536, 0.0
        %v1591 = vadd.f32 %v1589, %v1590
        %v1592 = vsel %vm1578, %v1537, 0.0
        %v1593 = vadd.f32 %v1591, %v1592
        %v1594 = vsel %vm1578, %v1538, 0.0
        %v1595 = vadd.f32 %v1593, %v1594
        %v1596 = vsel %vm1578, %v1539, 0.0
        %v1597 = vadd.f32 %v1595, %v1596
        %v1598 = vsel %vm1578, %v1540, 0.0
        %v1599 = vadd.f32 %v1597, %v1598
        %v1600 = vsel %vm1578, %v1541, 0.0
        %v1601 = vadd.f32 %v1599, %v1600
        %v1602 = vsel %vm1578, %v1542, 0.0
        %v1603 = vadd.f32 %v1601, %v1602
        %v1604 = vsel %vm1578, %v1543, 0.0
        %v1605 = vadd.f32 %v1603, %v1604
        %v1606 = vsel %vm1578, %v1544, 0.0
        %v1607 = vadd.f32 %v1605, %v1606
        %v1608 = vsel %vm1578, %v1545, 0.0
        %v1609 = vadd.f32 %v1607, %v1608
        %v1610 = vrot.slane %v1609, 4
        %v1611 = vadd.f32 %v1609, %v1610
        %v1612 = vrot.slane %v1611, 2
        %v1613 = vadd.f32 %v1611, %v1612
        %v1614 = vrot.slane %v1613, 1
        %v1615 = vadd.f32 %v1613, %v1614
        %vm1616 = vcmask 57344
        %1617 = vst.msk [vmem:[%s403] sm:$0x1] %vm1616, %v1615
        %v1618 = vmul.f32 %v1530, %v1530
        %v1619 = vmul.f32 %v1531, %v1531
        %v1620 = vmul.f32 %v1532, %v1532
        %v1621 = vmul.f32 %v1533, %v1533
        %v1622 = vmul.f32 %v1534, %v1534
        %v1623 = vmul.f32 %v1535, %v1535
        %v1624 = vmul.f32 %v1536, %v1536
        %v1625 = vmul.f32 %v1537, %v1537
        %v1626 = vmul.f32 %v1538, %v1538
        %v1627 = vmul.f32 %v1539, %v1539
        %v1628 = vmul.f32 %v1540, %v1540
        %v1629 = vmul.f32 %v1541, %v1541
        %v1630 = vmul.f32 %v1542, %v1542
        %v1631 = vmul.f32 %v1543, %v1543
        %v1632 = vmul.f32 %v1544, %v1544
        %v1633 = vmul.f32 %v1545, %v1545
        %v1634 = vsel %vm1578, %v1618, 0.0
        %v1635 = vsel %vm1578, %v1619, 0.0
        %v1636 = vadd.f32 %v1634, %v1635
        %v1637 = vsel %vm1578, %v1620, 0.0
        %v1638 = vadd.f32 %v1636, %v1637
        %v1639 = vsel %vm1578, %v1621, 0.0
        %v1640 = vadd.f32 %v1638, %v1639
        %v1641 = vsel %vm1578, %v1622, 0.0
        %v1642 = vadd.f32 %v1640, %v1641
        %v1643 = vsel %vm1578, %v1623, 0.0
        %v1644 = vadd.f32 %v1642, %v1643
        %v1645 = vsel %vm1578, %v1624, 0.0
        %v1646 = vadd.f32 %v1644, %v1645
        %v1647 = vsel %vm1578, %v1625, 0.0
        %v1648 = vadd.f32 %v1646, %v1647
        %v1649 = vsel %vm1578, %v1626, 0.0
        %v1650 = vadd.f32 %v1648, %v1649
        %v1651 = vsel %vm1578, %v1627, 0.0
        %v1652 = vadd.f32 %v1650, %v1651
        %v1653 = vsel %vm1578, %v1628, 0.0
        %v1654 = vadd.f32 %v1652, %v1653
        %v1655 = vsel %vm1578, %v1629, 0.0
        %v1656 = vadd.f32 %v1654, %v1655
        %v1657 = vsel %vm1578, %v1630, 0.0
        %v1658 = vadd.f32 %v1656, %v1657
        %v1659 = vsel %vm1578, %v1631, 0.0
        %v1660 = vadd.f32 %v1658, %v1659
        %v1661 = vsel %vm1578, %v1632, 0.0
        %v1662 = vadd.f32 %v1660, %v1661
        %v1663 = vsel %vm1578, %v1633, 0.0
        %v1664 = vadd.f32 %v1662, %v1663
        %v1665 = vrot.slane %v1664, 4
        %v1666 = vadd.f32 %v1664, %v1665
        %v1667 = vrot.slane %v1666, 2
        %v1668 = vadd.f32 %v1666, %v1667
        %v1669 = vrot.slane %v1668, 1
        %v1670 = vadd.f32 %v1668, %v1669
        %1671 = vst.msk [vmem:[%s403 + $0x1] sm:$0x1] %vm1616, %v1670
        %s1672 = smul.u32 8, %s27
        %p1673 = scmp.lt.s32.totalorder %s26, 1
        %s1674 = scalar_select %p1673, %s26, 1
        %p1675 = scmp.lt.s32.totalorder %s1672, 15
        %s1676 = scalar_select %p1675, %s1672, 15
        %s1677 = smul.addr %s1676, 2
        %s1678 = smul.addr %s1674, 32
        %s1679 = sadd.s32 %s1677, %s1678
        %s1680 = smul.addr %s1679, 4
        %s1681 = scalar_lea.vmem %s6, %s1680
        %s1682 = sand.u32 %s235, 1
        %s1683 = scalar_lea.sflag [#allocation4], %s1682
        %s1684 = sand.u32 %s235, 1
        %s1685 = smul.addr %s1684, 2
        %s1686 = scalar_lea.vmem [#allocation3], %s1685
        // Predicated region
        $region61: #{tpu_custom_call.1} parent=43 // pred_check
          %p1687 = pneg %p217
        $region62: #{tpu_custom_call.1} parent=43 // pred_check_branch
          %1689 = sbr.rel (%p1687) target = $region64
        $region63: #{tpu_custom_call.1} parent=43 // pred_region
          %s1690 = smul.u32 8, %s27
        $region64: #{tpu_custom_call.1} parent=43 // pred_fallthru
          _
        // Predicated region
        $region65: #{tpu_custom_call.1} parent=43 // pred_check
          %p1691 = pneg %p245
        $region66: #{tpu_custom_call.1} parent=43 // pred_check_branch
          %1693 = sbr.rel (%p1691) target = $region68
        $region67: #{tpu_custom_call.1} parent=43 // pred_region
          %1695 = vsyncadd %s1683, 0
          %s1696 = smul.addr %s26, 2
          %s1697 = sadd.s32 %s27, %s1696
          %s1698 = smul.addr %s1697, 2
          %s1699 = scalar_lea.hbm %s7, %s1698
          %s1701 = sshll.u32 %s1686, 4
          %s1702 = int_to_ptr.vmem [resolvable:$true] %s1701
          %s1703 = sshll.u32 %s1699, 4
          %s1704 = int_to_ptr.hbm [resolvable:$true] %s1703
          %1706 = dma.vmem_to_hbm [thread:$0]  %s1702, 32, %s1704, %s1683
        $region68: #{tpu_custom_call.1} parent=43 // pred_fallthru
          _
      $region44: #{tpu_custom_call.1} parent=5 // pred_fallthru
        _
      %p1707 = scmp.le.s32.totalorder 2, %s17
      // Predicated region
      $region69: #{tpu_custom_call.1} parent=5 // pred_check
        %p1708 = pneg %p1707
      $region70: #{tpu_custom_call.1} parent=5 // pred_check_branch
        %1710 = sbr.rel (%p1708) target = $region72
      $region71: #{tpu_custom_call.1} parent=5 // pred_region
        %s1711 = ssub.s32 %s17, 2
        // Predicated region
        $region73: #{tpu_custom_call.1} parent=71 // pred_check
          %p1712 = pneg %p223
        $region74: #{tpu_custom_call.1} parent=71 // pred_check_branch
          %1714 = sbr.rel (%p1712) target = $region76
        $region75: #{tpu_custom_call.1} parent=71 // pred_region
          %s1715 = smul.u32 8, %s29
          %p1716 = scmp.lt.s32.totalorder %s28, 1
          %s1717 = scalar_select %p1716, %s28, 1
          %p1718 = scmp.lt.s32.totalorder %s1715, 15
          %s1719 = scalar_select %p1718, %s1715, 15
          %s1720 = smul.addr %s1719, 2
          %s1721 = smul.addr %s1717, 32
          %s1722 = sadd.s32 %s1720, %s1721
          %s1723 = smul.addr %s1722, 4
          %s1724 = scalar_lea.vmem %s6, %s1723
        $region76: #{tpu_custom_call.1} parent=71 // pred_fallthru
          _
        // Predicated region
        $region77: #{tpu_custom_call.1} parent=71 // pred_check
          %p1725 = pneg %p251
        $region78: #{tpu_custom_call.1} parent=71 // pred_check_branch
          %1727 = sbr.rel (%p1725) target = $region80
        $region79: #{tpu_custom_call.1} parent=71 // pred_region
          %s1728 = sand.u32 %s236, 1
          %s1729 = scalar_lea.sflag [#allocation4], %s1728
          %s1730 = sand.u32 %s236, 1
          %s1731 = smul.addr %s1730, 2
          %s1732 = scalar_lea.vmem [#allocation3], %s1731
          %1734 = dma.done %s1729, 32
        $region80: #{tpu_custom_call.1} parent=71 // pred_fallthru
          _
      $region72: #{tpu_custom_call.1} parent=5 // pred_fallthru
        _
    $region6: #{tpu_custom_call.1} parent=1 // loop_footer
      %s21 = sadd.s32 1, %s17
    $region7: #{tpu_custom_call.1} parent=1 // loop_footer_branch
      %16 = sbr.rel target = $region3
    $region8: #{tpu_custom_call.1} parent=1 // loop_exit
      _
    %1735 = vsyncpa [#allocation4], 1
    %s1736 = scalar_lea.sflag [#allocation4], 1
    %1737 = vsyncpa %s1736, 1

</llo_original>
